<compile_context>
chip_gen: v6e
topology: v6e:2x2x1
jax: 0.10.0
libtpu: 0.0.40
codegen_flags: <defaults>
</compile_context>

<pallas_src>
import functools
import math

import jax
import jax.numpy as jnp
import numpy as np
from jax import lax
from jax.experimental import pallas as pl
from jax.experimental.pallas import tpu as pltpu

SQRT_HALF = float(math.sqrt(0.5))
BF16 = jnp.bfloat16


def _round_up(x, m):
    return (x + m - 1) // m * m


# ----------------------------------------------------------------------------
# Fused per-Flow Pallas kernel
# ----------------------------------------------------------------------------

def _flow_kernel(x_ref, c_ref, loc_ref, scale_ref,
                 fw_ref, fb_ref, wfg_ref, wcond_ref, bcond_ref,
                 wrs_ref, brs_ref, f1w_ref, f1b_ref, f2w_ref, f2b_ref,
                 y_ref, detp_ref, hbuf,
                 *, K, dils, T, max_pad, half, R, G, S):
    # ---- ActNorm: scale * (x + loc), split into channel halves (f32) -------
    loc = loc_ref[...]                         # (1, C)
    scale = scale_ref[...]                     # (1, C)
    x = x_ref[0]                               # (T, C)
    in_a = scale[:, :half] * (x[:, :half] + loc[:, :half])   # (T, half) f32
    in_b = scale[:, half:] * (x[:, half:] + loc[:, half:])   # (T, half) f32
    c_bf = c_ref[0].astype(BF16)               # (T, chh) bf16 matmul operand

    # ---- residual stream lives in a zero-haloed bf16 VMEM scratch ----------
    # Only the halo rows are zeroed; the interior is fully overwritten below
    # and on every layer.  Re-zeroed each grid step (parallel semantics).
    hbuf[:max_pad, :] = jnp.zeros((max_pad, R), BF16)
    hbuf[max_pad + T:max_pad + T + max_pad, :] = jnp.zeros((max_pad, R), BF16)

    if R > half:
        in_a_pad = jnp.concatenate(
            [in_a, jnp.zeros((T, R - half), jnp.float32)], axis=-1)
    else:
        in_a_pad = in_a
    hbuf[max_pad:max_pad + T, :] = in_a_pad.astype(BF16)

    # ---- front conv (kernel K, dil 1): K accumulated bf16 MXU matmuls ------
    pad_l = (K - 1) // 2
    h = None
    for k in range(K):
        s = max_pad + k - pad_l                # static, always inside hbuf
        d = jnp.dot(hbuf[s:s + T, :], fw_ref[k],
                    preferred_element_type=jnp.float32)
        h = d if h is None else h + d
    h = h + fb_ref[...]                        # (T, R) f32

    # ---- res-blocks: per-layer cond matmul + K accumulated dilated taps ----
    skip = jnp.zeros((T, S), jnp.float32)
    for l, dil in enumerate(dils):
        hbuf[max_pad:max_pad + T, :] = h.astype(BF16)
        pad_l = dil * (K - 1) // 2
        fg = (jnp.dot(c_bf, wcond_ref[l], preferred_element_type=jnp.float32)
              + bcond_ref[l])                  # (T, 2G) f32 (cond + f/g bias)
        for k in range(K):
            s = max_pad + k * dil - pad_l
            fg = fg + jnp.dot(hbuf[s:s + T, :], wfg_ref[l * K + k],
                              preferred_element_type=jnp.float32)
        gated = jnp.tanh(fg[:, :G]) * jax.nn.sigmoid(fg[:, G:])   # f32
        rs = (jnp.dot(gated.astype(BF16), wrs_ref[l],
                      preferred_element_type=jnp.float32) + brs_ref[l])
        h = (h + rs[:, :R]) * SQRT_HALF        # residual add in f32
        skip = skip + rs[:, R:]                # skip add in f32

    # ---- final ReLU -> 1x1 -> ReLU -> 1x1 (bf16 MXU, f32 accum) ------------
    s0 = jnp.maximum(skip, 0.0)
    s1 = jnp.maximum(
        jnp.dot(s0.astype(BF16), f1w_ref[...],
                preferred_element_type=jnp.float32) + f1b_ref[...], 0.0)
    net = (jnp.dot(s1.astype(BF16), f2w_ref[...],
                   preferred_element_type=jnp.float32) + f2b_ref[...])

    # ---- affine coupling + change_order, fused lane-dense output -----------
    neg_log_s = -net[:, :half]
    t = net[:, half:]
    out_b = (in_b - t) * jnp.exp(neg_log_s)
    y_ref[0] = jnp.concatenate([out_b, in_a], axis=-1).astype(y_ref.dtype)
    det = jnp.sum(jnp.sum(neg_log_s, axis=0, keepdims=True),
                  axis=1, keepdims=True)       # (1, 1) per-batch partial
    detp_ref[0] = det


def flow_apply(prep, x_tl, c_a):
    """One Flow (ActNorm + AffineCoupling + change_order), channel-last.

    x_tl: (B, T, C) flow input.  c_a: (B, T, chh) first half of conditioning.
    Returns (y_tl, logdet) with y_tl already change_order'd.
    """
    B, T, C = x_tl.shape
    half = C // 2
    chh = c_a.shape[2]
    K, R, G, S = prep['K'], prep['R'], prep['G'], prep['S']
    dils = prep['dils']
    max_pad = prep['max_pad']

    # ActNorm data-dependent init (pretrained=False): per-channel stats over
    # B*T samples; torch std is unbiased.
    # TODO(synk): for a trained checkpoint pass stored loc/scale (pretrained
    # path) and skip these two HBM passes over x.
    mean = jnp.mean(x_tl, axis=(0, 1))
    std = jnp.std(x_tl, axis=(0, 1), ddof=1)
    loc = (-mean).reshape(1, C)
    scale = (1.0 / (std + 1e-6)).reshape(1, C)
    logdet_an = jnp.sum(jnp.log(jnp.abs(scale))) * (B * T)

    kernel = functools.partial(_flow_kernel, K=K, dils=dils, T=T,
                               max_pad=max_pad, half=half, R=R, G=G, S=S)

    def whole(a):
        zeros = (0,) * a.ndim
        return pl.BlockSpec(a.shape, lambda b: zeros)

    y, det_b = pl.pallas_call(
        kernel,
        out_shape=(jax.ShapeDtypeStruct((B, T, C), jnp.float32),
                   jax.ShapeDtypeStruct((B, 1, 1), jnp.float32)),
        grid=(B,),
        in_specs=[
            pl.BlockSpec((1, T, C), lambda b: (b, 0, 0)),
            pl.BlockSpec((1, T, chh), lambda b: (b, 0, 0)),
            whole(loc), whole(scale),
            whole(prep['front_w']), whole(prep['front_b']),
            whole(prep['w_fg']), whole(prep['w_cond']), whole(prep['b_cond']),
            whole(prep['w_rs']), whole(prep['b_rs']),
            whole(prep['f1w']), whole(prep['f1b']),
            whole(prep['f2w']), whole(prep['f2b']),
        ],
        out_specs=(pl.BlockSpec((1, T, C), lambda b: (b, 0, 0)),
                   pl.BlockSpec((1, 1, 1), lambda b: (b, 0, 0))),
        scratch_shapes=[pltpu.VMEM((T + 2 * max_pad, R), BF16)],
        compiler_params=pltpu.CompilerParams(
            dimension_semantics=("parallel",),
            vmem_limit_bytes=48 * 1024 * 1024),
    )(x_tl, c_a, loc, scale,
      prep['front_w'], prep['front_b'], prep['w_fg'], prep['w_cond'],
      prep['b_cond'], prep['w_rs'], prep['b_rs'],
      prep['f1w'], prep['f1b'], prep['f2w'], prep['f2b'])

    return y, logdet_an + jnp.sum(det_b)


# ----------------------------------------------------------------------------
# Block forward (Pallas path)
# ----------------------------------------------------------------------------

def squeeze_nct(x):
    B, C, T = x.shape
    return (x.reshape(B, C, T // 2, 2).transpose(0, 1, 3, 2)
            .reshape(B, 2 * C, T // 2))


def block_forward(params, x, c):
    """Block.forward (split=False).  x: (B, C, T), c: (B, Cc, T) — NCT."""
    xs = squeeze_nct(x)
    cs = squeeze_nct(c)
    chh = cs.shape[1] // 2

    x_tl = jnp.transpose(xs, (0, 2, 1))          # (B, T, C) channel-last
    c_tl = jnp.transpose(cs, (0, 2, 1))
    ca, cb = c_tl[:, :, :chh], c_tl[:, :, chh:]

    logdet = jnp.float32(0.0)
    for prep in params['flows_prepped']:
        x_tl, det = flow_apply(prep, x_tl, ca)
        logdet = logdet + det
        ca, cb = cb, ca                          # change_order on c (free swap)

    out = jnp.transpose(x_tl, (0, 2, 1))
    c_out = jnp.transpose(jnp.concatenate([ca, cb], axis=2), (0, 2, 1))
    log_p = jnp.float32(0.0)                     # split=False
    return out, c_out, logdet, log_p


# ----------------------------------------------------------------------------
# Parameter init (synthetic) + prep of fused/stacked bf16 weights
# ----------------------------------------------------------------------------

def init_wavenet_params(key, in_channel, cin_channel, filter_size, num_layer,
                        kernel_size=3):
    half_in = in_channel // 2
    half_cin = cin_channel // 2
    R = G = S = filter_size
    K = kernel_size
    keys = iter(jax.random.split(key, 8 + 16 * num_layer))

    def w(shape, scl):
        return jax.random.normal(next(keys), shape, jnp.float32) * scl

    p = {
        'front_w': w((K, half_in, R), 0.3 / math.sqrt(half_in * K)),
        'front_b': w((1, R), 0.1),
        'res': [],
        'final1_w': w((1, S, S), 0.3 / math.sqrt(S)),
        'final1_b': w((1, S), 0.1),
        'final2_w': w((1, S, in_channel), 0.1 / math.sqrt(S)),
        'final2_b': w((1, in_channel), 0.02),
    }
    for n in range(num_layer):
        p['res'].append(dict(
            dil=2 ** n,
            wf=w((K, R, G), 0.3 / math.sqrt(R * K)), bf=w((1, G), 0.1),
            wg=w((K, R, G), 0.3 / math.sqrt(R * K)), bg=w((1, G), 0.1),
            wcf=w((half_cin, G), 0.3 / math.sqrt(half_cin)), bcf=w((1, G), 0.1),
            wcg=w((half_cin, G), 0.3 / math.sqrt(half_cin)), bcg=w((1, G), 0.1),
            wres=w((G, R), 0.3 / math.sqrt(G)), bres=w((1, R), 0.1),
            wskip=w((G, S), 0.3 / math.sqrt(G)), bskip=w((1, S), 0.1),
        ))
    return p


def prep_flow_params(p):
    K, half, R = p['front_w'].shape
    G = p['res'][0]['wf'].shape[2]
    S = p['res'][0]['wskip'].shape[1]
    assert K % 2 == 1, "same-padding arithmetic assumes odd kernel_size"
    assert half <= R, "front conv input channels must fit residual width"

    # Front conv weight: zero-pad input channels half->R so each tap matmuls
    # the full-width (T, R) residual buffer rows.
    fw = jnp.zeros((K, R, R), jnp.float32).at[:, :half, :].set(p['front_w'])

    w_fg, w_rs, b_rs, w_cond, b_cond, dils = [], [], [], [], [], []
    for blk in p['res']:
        dils.append(int(blk['dil']))
        for k in range(K):   # one (R, 2G) weight per (layer, tap)
            w_fg.append(jnp.concatenate([blk['wf'][k], blk['wg'][k]], axis=-1))
        w_rs.append(jnp.concatenate([blk['wres'], blk['wskip']], axis=-1))
        b_rs.append(jnp.concatenate([blk['bres'], blk['bskip']], axis=-1))
        w_cond.append(jnp.concatenate([blk['wcf'], blk['wcg']], axis=-1))
        b_cond.append(jnp.concatenate([blk['bcf'] + blk['bf'],
                                       blk['bcg'] + blk['bg']], axis=-1))
    max_pad = _round_up(max(d * (K - 1) // 2 for d in dils + [1]), 8)

    return {
        'K': K, 'R': R, 'G': G, 'S': S, 'dils': tuple(dils), 'max_pad': max_pad,
        'front_w': fw.astype(BF16), 'front_b': p['front_b'],
        'w_fg': jnp.stack(w_fg).astype(BF16),        # (L*K, R, 2G) bf16
        'w_rs': jnp.stack(w_rs).astype(BF16),        # (L, G, R+S)  bf16
        'b_rs': jnp.stack(b_rs),                     # (L, 1, R+S)  f32
        'w_cond': jnp.stack(w_cond).astype(BF16),    # (L, chh, 2G) bf16
        'b_cond': jnp.stack(b_cond),                 # (L, 1, 2G)   f32
        'f1w': p['final1_w'][0].astype(BF16), 'f1b': p['final1_b'],
        'f2w': p['final2_w'][0].astype(BF16), 'f2b': p['final2_b'],
    }


def init_block_params(key, in_channel, cin_channel, n_flow, n_layer,
                      hidden_channel):
    squeeze_dim = in_channel * 2
    squeeze_dim_c = cin_channel * 2
    flows = [init_wavenet_params(k, squeeze_dim, squeeze_dim_c,
                                 hidden_channel, n_layer)
             for k in jax.random.split(key, n_flow)]
    return {'flows': flows,
            'flows_prepped': [prep_flow_params(p) for p in flows]}


# ----------------------------------------------------------------------------
# Pure-JAX f32 reference (lax.conv_general_dilated) for validation
# ----------------------------------------------------------------------------

def _conv1d_ref(x, w, b, dilation):
    pad = dilation * (w.shape[2] - 1) // 2
    y = lax.conv_general_dilated(x, w, window_strides=(1,),
                                 padding=[(pad, pad)],
                                 rhs_dilation=(dilation,),
                                 dimension_numbers=('NCH', 'OIH', 'NCH'))
    return y + b[None, :, None]


def _wavenet_ref(p, x_a, c_a):
    tw3 = lambda w: jnp.transpose(w, (2, 1, 0))            # (K,Ci,Co)->(Co,Ci,K)
    tw2 = lambda w: jnp.transpose(w, (1, 0))[:, :, None]   # (Ci,Co)->(Co,Ci,1)
    h = _conv1d_ref(x_a, tw3(p['front_w']), p['front_b'][0], 1)
    skip = 0.0
    for blk in p['res']:
        dil = blk['dil']
        hf = (_conv1d_ref(h, tw3(blk['wf']), blk['bf'][0], dil)
              + _conv1d_ref(c_a, tw2(blk['wcf']), blk['bcf'][0], 1))
        hg = (_conv1d_ref(h, tw3(blk['wg']), blk['bg'][0], dil)
              + _conv1d_ref(c_a, tw2(blk['wcg']), blk['bcg'][0], 1))
        out = jnp.tanh(hf) * jax.nn.sigmoid(hg)
        res = _conv1d_ref(out, tw2(blk['wres']), blk['bres'][0], 1)
        sk = _conv1d_ref(out, tw2(blk['wskip']), blk['bskip'][0], 1)
        h = (h + res) * SQRT_HALF
        skip = skip + sk
    out = jax.nn.relu(skip)
    out = jax.nn.relu(_conv1d_ref(out, tw3(p['final1_w']),
                                  p['final1_b'][0], 1))
    out = _conv1d_ref(out, tw3(p['final2_w']), p['final2_b'][0], 1)
    return out


def _flow_ref(p, x, c):
    B, C, T = x.shape
    mean = jnp.mean(x, axis=(0, 2))
    std = jnp.std(x, axis=(0, 2), ddof=1)
    loc = -mean
    scale = 1.0 / (std + 1e-6)
    out = scale[None, :, None] * (x + loc[None, :, None])
    logdet = jnp.sum(jnp.log(jnp.abs(scale))) * B * T
    half = C // 2
    chh = c.shape[1] // 2
    in_a, in_b = out[:, :half], out[:, half:]
    c_a, c_b = c[:, :chh], c[:, chh:]
    net = _wavenet_ref(p, in_a, c_a)
    log_s, t = net[:, :half], net[:, half:]
    out_b = (in_b - t) * jnp.exp(-log_s)
    det = jnp.sum(-log_s)
    return (jnp.concatenate([out_b, in_a], axis=1),
            jnp.concatenate([c_b, c_a], axis=1), logdet + det)


def block_forward_ref(params, x, c):
    out = squeeze_nct(x)
    cc = squeeze_nct(c)
    logdet = jnp.float32(0.0)
    for p in params['flows']:
        out, cc, det = _flow_ref(p, out, cc)
        logdet = logdet + det
    return out, cc, logdet, jnp.float32(0.0)


# ----------------------------------------------------------------------------
# Main
# ----------------------------------------------------------------------------

if __name__ == "__main__":
    B, in_channel, cin_channel, T = 2, 4, 4, 16
    n_flow, n_layer, hidden_channel = 2, 2, 32

    key = jax.random.PRNGKey(0)
    kx, kc, kp = jax.random.split(key, 3)
    x = jax.random.normal(kx, (B, in_channel, T), jnp.float32)
    c = jax.random.normal(kc, (B, cin_channel, T), jnp.float32)
    params = init_block_params(kp, in_channel, cin_channel, n_flow, n_layer,
                               hidden_channel)

    out, c_out, logdet, log_p = block_forward(params, x, c)
    out, c_out, logdet, log_p = jax.block_until_ready((out, c_out, logdet, log_p))

    out_r, c_r, logdet_r, log_p_r = block_forward_ref(params, x, c)
    # Kernel uses bf16 MXU operands (f32 accumulation); reference is pure f32,
    # so tolerances reflect bf16 rounding of weights/activations.
    np.testing.assert_allclose(np.asarray(out), np.asarray(out_r),
                               rtol=3e-2, atol=3e-2)
    np.testing.assert_allclose(np.asarray(c_out), np.asarray(c_r),
                               rtol=1e-5, atol=1e-5)
    np.testing.assert_allclose(np.asarray(logdet), np.asarray(logdet_r),
                               rtol=3e-2, atol=1e-1)
    np.testing.assert_allclose(np.asarray(log_p), np.asarray(log_p_r),
                               rtol=1e-5, atol=1e-5)

    print("KERNEL_OK")
</pallas_src>

<mosaic_0001>
module attributes {stable_mosaic.version = 11 : i64} {
  func.func @_flow_kernel(%arg0: i32, %arg1: memref<1x8x8xf32, #tpu.memory_space<vmem>>, %arg2: memref<1x8x4xf32, #tpu.memory_space<vmem>>, %arg3: memref<1x8xf32, #tpu.memory_space<vmem>>, %arg4: memref<1x8xf32, #tpu.memory_space<vmem>>, %arg5: memref<3x32x32xbf16, #tpu.memory_space<vmem>>, %arg6: memref<1x32xf32, #tpu.memory_space<vmem>>, %arg7: memref<6x32x64xbf16, #tpu.memory_space<vmem>>, %arg8: memref<2x4x64xbf16, #tpu.memory_space<vmem>>, %arg9: memref<2x1x64xf32, #tpu.memory_space<vmem>>, %arg10: memref<2x32x64xbf16, #tpu.memory_space<vmem>>, %arg11: memref<2x1x64xf32, #tpu.memory_space<vmem>>, %arg12: memref<32x32xbf16, #tpu.memory_space<vmem>>, %arg13: memref<1x32xf32, #tpu.memory_space<vmem>>, %arg14: memref<32x8xbf16, #tpu.memory_space<vmem>>, %arg15: memref<1x8xf32, #tpu.memory_space<vmem>>, %arg16: memref<1x8x8xf32, #tpu.memory_space<vmem>>, %arg17: memref<1x1x1xf32, #tpu.memory_space<vmem>>, %arg18: memref<24x32xbf16, #tpu.memory_space<vmem>>) attributes {dimension_semantics = [#tpu.dimension_semantics<parallel>], iteration_bounds = array<i64: 2>, scalar_prefetch = 0 : i64, scratch_operands = 1 : i64, tpu.core_type = #tpu.core_type<tc>, window_params = [{transform_indices = @transform_0, window_bounds = array<i64: 1, 8, 8>}, {transform_indices = @transform_1, window_bounds = array<i64: 1, 8, 4>}, {pipeline_mode = #tpu.pipeline_mode<synchronous>, transform_indices = @transform_2, window_bounds = array<i64: 1, 8>}, {pipeline_mode = #tpu.pipeline_mode<synchronous>, transform_indices = @transform_3, window_bounds = array<i64: 1, 8>}, {pipeline_mode = #tpu.pipeline_mode<synchronous>, transform_indices = @transform_4, window_bounds = array<i64: 3, 32, 32>}, {pipeline_mode = #tpu.pipeline_mode<synchronous>, transform_indices = @transform_5, window_bounds = array<i64: 1, 32>}, {pipeline_mode = #tpu.pipeline_mode<synchronous>, transform_indices = @transform_6, window_bounds = array<i64: 6, 32, 64>}, {pipeline_mode = #tpu.pipeline_mode<synchronous>, transform_indices = @transform_7, window_bounds = array<i64: 2, 4, 64>}, {pipeline_mode = #tpu.pipeline_mode<synchronous>, transform_indices = @transform_8, window_bounds = array<i64: 2, 1, 64>}, {pipeline_mode = #tpu.pipeline_mode<synchronous>, transform_indices = @transform_9, window_bounds = array<i64: 2, 32, 64>}, {pipeline_mode = #tpu.pipeline_mode<synchronous>, transform_indices = @transform_10, window_bounds = array<i64: 2, 1, 64>}, {pipeline_mode = #tpu.pipeline_mode<synchronous>, transform_indices = @transform_11, window_bounds = array<i64: 32, 32>}, {pipeline_mode = #tpu.pipeline_mode<synchronous>, transform_indices = @transform_12, window_bounds = array<i64: 1, 32>}, {pipeline_mode = #tpu.pipeline_mode<synchronous>, transform_indices = @transform_13, window_bounds = array<i64: 32, 8>}, {pipeline_mode = #tpu.pipeline_mode<synchronous>, transform_indices = @transform_14, window_bounds = array<i64: 1, 8>}, {transform_indices = @transform_15, window_bounds = array<i64: 1, 8, 8>}, {transform_indices = @transform_16, window_bounds = array<i64: 1, 1, 1>}]} {
    %c0 = arith.constant 0 : index
    %c0_0 = arith.constant 0 : index
    %0 = vector.load %arg3[%c0, %c0_0] : memref<1x8xf32, #tpu.memory_space<vmem>>, vector<1x8xf32>
    %c0_1 = arith.constant 0 : index
    %c0_2 = arith.constant 0 : index
    %1 = vector.load %arg4[%c0_1, %c0_2] : memref<1x8xf32, #tpu.memory_space<vmem>>, vector<1x8xf32>
    %c0_3 = arith.constant 0 : index
    %c0_4 = arith.constant 0 : index
    %c0_5 = arith.constant 0 : index
    %2 = vector.load %arg1[%c0_3, %c0_4, %c0_5] : memref<1x8x8xf32, #tpu.memory_space<vmem>>, vector<1x8x8xf32>
    %3 = vector.shape_cast %2 : vector<1x8x8xf32> to vector<8x8xf32>
    %4 = vector.extract_strided_slice %1 {offsets = [0, 0], sizes = [1, 4], strides = [1, 1]} : vector<1x8xf32> to vector<1x4xf32>
    %5 = vector.extract_strided_slice %3 {offsets = [0, 0], sizes = [8, 4], strides = [1, 1]} : vector<8x8xf32> to vector<8x4xf32>
    %6 = vector.extract_strided_slice %0 {offsets = [0, 0], sizes = [1, 4], strides = [1, 1]} : vector<1x8xf32> to vector<1x4xf32>
    %7 = vector.broadcast %6 : vector<1x4xf32> to vector<8x4xf32>
    %8 = arith.addf %5, %7 : vector<8x4xf32>
    %9 = vector.broadcast %4 : vector<1x4xf32> to vector<8x4xf32>
    %10 = arith.mulf %9, %8 : vector<8x4xf32>
    %11 = vector.extract_strided_slice %1 {offsets = [0, 4], sizes = [1, 4], strides = [1, 1]} : vector<1x8xf32> to vector<1x4xf32>
    %12 = vector.extract_strided_slice %3 {offsets = [0, 4], sizes = [8, 4], strides = [1, 1]} : vector<8x8xf32> to vector<8x4xf32>
    %13 = vector.extract_strided_slice %0 {offsets = [0, 4], sizes = [1, 4], strides = [1, 1]} : vector<1x8xf32> to vector<1x4xf32>
    %14 = vector.broadcast %13 : vector<1x4xf32> to vector<8x4xf32>
    %15 = arith.addf %12, %14 : vector<8x4xf32>
    %16 = vector.broadcast %11 : vector<1x4xf32> to vector<8x4xf32>
    %17 = arith.mulf %16, %15 : vector<8x4xf32>
    %c0_6 = arith.constant 0 : index
    %c0_7 = arith.constant 0 : index
    %c0_8 = arith.constant 0 : index
    %18 = vector.load %arg2[%c0_6, %c0_7, %c0_8] : memref<1x8x4xf32, #tpu.memory_space<vmem>>, vector<1x8x4xf32>
    %19 = vector.shape_cast %18 : vector<1x8x4xf32> to vector<8x4xf32>
    %20 = arith.truncf %19 : vector<8x4xf32> to vector<8x4xbf16>
    %cst = arith.constant 0.000000e+00 : bf16
    %21 = vector.broadcast %cst : bf16 to vector<8x32xbf16>
    %c0_9 = arith.constant 0 : index
    %c0_10 = arith.constant 0 : index
    %22 = vector.load %arg18[%c0_9, %c0_10] : memref<24x32xbf16, #tpu.memory_space<vmem>>, vector<8x32xbf16>
    tpu.vector_store %arg18[%c0_9, %c0_10], %21 {strides = array<i32>} : memref<24x32xbf16, #tpu.memory_space<vmem>>, vector<8x32xbf16>,
    %cst_11 = arith.constant 0.000000e+00 : bf16
    %23 = vector.broadcast %cst_11 : bf16 to vector<8x32xbf16>
    %c16 = arith.constant 16 : index
    %c0_12 = arith.constant 0 : index
    %24 = vector.load %arg18[%c16, %c0_12] : memref<24x32xbf16, #tpu.memory_space<vmem>>, vector<8x32xbf16>
    tpu.vector_store %arg18[%c16, %c0_12], %23 {strides = array<i32>} : memref<24x32xbf16, #tpu.memory_space<vmem>>, vector<8x32xbf16>,
    %cst_13 = arith.constant 0.000000e+00 : f32
    %25 = vector.broadcast %cst_13 : f32 to vector<8x28xf32>
    %26 = tpu.concatenate %10, %25 in 1 : vector<8x4xf32>, vector<8x28xf32> -> vector<8x32xf32>
    %27 = arith.truncf %26 : vector<8x32xf32> to vector<8x32xbf16>
    %c8 = arith.constant 8 : index
    %c0_14 = arith.constant 0 : index
    %28 = vector.load %arg18[%c8, %c0_14] : memref<24x32xbf16, #tpu.memory_space<vmem>>, vector<8x32xbf16>
    tpu.vector_store %arg18[%c8, %c0_14], %27 {strides = array<i32>} : memref<24x32xbf16, #tpu.memory_space<vmem>>, vector<8x32xbf16>,
    %c7 = arith.constant 7 : index
    %c0_15 = arith.constant 0 : index
    %29 = vector.load %arg18[%c7, %c0_15] : memref<24x32xbf16, #tpu.memory_space<vmem>>, vector<8x32xbf16>
    %c0_16 = arith.constant 0 : index
    %c0_17 = arith.constant 0 : index
    %c0_18 = arith.constant 0 : index
    %30 = vector.load %arg5[%c0_16, %c0_17, %c0_18] : memref<3x32x32xbf16, #tpu.memory_space<vmem>>, vector<1x32x32xbf16>
    %31 = vector.shape_cast %30 : vector<1x32x32xbf16> to vector<32x32xbf16>
    %cst_19 = arith.constant dense<0.000000e+00> : vector<8x32xf32>
    %32 = tpu.matmul %29, %31, %cst_19 {dimension_numbers = #tpu.dot_dimension_numbers<[1], [0], [0], [1], [0, 0, 1, 1], [], []>} : vector<8x32xbf16>, vector<32x32xbf16>, vector<8x32xf32> -> vector<8x32xf32>
    %c8_20 = arith.constant 8 : index
    %c0_21 = arith.constant 0 : index
    %33 = vector.load %arg18[%c8_20, %c0_21] : memref<24x32xbf16, #tpu.memory_space<vmem>>, vector<8x32xbf16>
    %c1 = arith.constant 1 : index
    %c0_22 = arith.constant 0 : index
    %c0_23 = arith.constant 0 : index
    %34 = vector.load %arg5[%c1, %c0_22, %c0_23] : memref<3x32x32xbf16, #tpu.memory_space<vmem>>, vector<1x32x32xbf16>
    %35 = vector.shape_cast %34 : vector<1x32x32xbf16> to vector<32x32xbf16>
    %cst_24 = arith.constant dense<0.000000e+00> : vector<8x32xf32>
    %36 = tpu.matmul %33, %35, %cst_24 {dimension_numbers = #tpu.dot_dimension_numbers<[1], [0], [0], [1], [0, 0, 1, 1], [], []>} : vector<8x32xbf16>, vector<32x32xbf16>, vector<8x32xf32> -> vector<8x32xf32>
    %37 = arith.addf %32, %36 : vector<8x32xf32>
    %c9 = arith.constant 9 : index
    %c0_25 = arith.constant 0 : index
    %38 = vector.load %arg18[%c9, %c0_25] : memref<24x32xbf16, #tpu.memory_space<vmem>>, vector<8x32xbf16>
    %c2 = arith.constant 2 : index
    %c0_26 = arith.constant 0 : index
    %c0_27 = arith.constant 0 : index
    %39 = vector.load %arg5[%c2, %c0_26, %c0_27] : memref<3x32x32xbf16, #tpu.memory_space<vmem>>, vector<1x32x32xbf16>
    %40 = vector.shape_cast %39 : vector<1x32x32xbf16> to vector<32x32xbf16>
    %cst_28 = arith.constant dense<0.000000e+00> : vector<8x32xf32>
    %41 = tpu.matmul %38, %40, %cst_28 {dimension_numbers = #tpu.dot_dimension_numbers<[1], [0], [0], [1], [0, 0, 1, 1], [], []>} : vector<8x32xbf16>, vector<32x32xbf16>, vector<8x32xf32> -> vector<8x32xf32>
    %42 = arith.addf %37, %41 : vector<8x32xf32>
    %c0_29 = arith.constant 0 : index
    %c0_30 = arith.constant 0 : index
    %43 = vector.load %arg6[%c0_29, %c0_30] : memref<1x32xf32, #tpu.memory_space<vmem>>, vector<1x32xf32>
    %44 = vector.broadcast %43 : vector<1x32xf32> to vector<8x32xf32>
    %45 = arith.addf %42, %44 : vector<8x32xf32>
    %cst_31 = arith.constant 0.000000e+00 : f32
    %46 = vector.broadcast %cst_31 : f32 to vector<8x32xf32>
    %47 = arith.truncf %45 : vector<8x32xf32> to vector<8x32xbf16>
    %c8_32 = arith.constant 8 : index
    %c0_33 = arith.constant 0 : index
    %48 = vector.load %arg18[%c8_32, %c0_33] : memref<24x32xbf16, #tpu.memory_space<vmem>>, vector<8x32xbf16>
    tpu.vector_store %arg18[%c8_32, %c0_33], %47 {strides = array<i32>} : memref<24x32xbf16, #tpu.memory_space<vmem>>, vector<8x32xbf16>,
    %c0_34 = arith.constant 0 : index
    %c0_35 = arith.constant 0 : index
    %c0_36 = arith.constant 0 : index
    %49 = vector.load %arg8[%c0_34, %c0_35, %c0_36] : memref<2x4x64xbf16, #tpu.memory_space<vmem>>, vector<1x4x64xbf16>
    %50 = vector.shape_cast %49 : vector<1x4x64xbf16> to vector<4x64xbf16>
    %cst_37 = arith.constant dense<0.000000e+00> : vector<8x64xf32>
    %51 = tpu.matmul %20, %50, %cst_37 {dimension_numbers = #tpu.dot_dimension_numbers<[1], [0], [0], [1], [0, 0, 1, 1], [], []>} : vector<8x4xbf16>, vector<4x64xbf16>, vector<8x64xf32> -> vector<8x64xf32>
    %c0_38 = arith.constant 0 : index
    %c0_39 = arith.constant 0 : index
    %c0_40 = arith.constant 0 : index
    %52 = vector.load %arg9[%c0_38, %c0_39, %c0_40] : memref<2x1x64xf32, #tpu.memory_space<vmem>>, vector<1x1x64xf32>
    %53 = vector.shape_cast %52 : vector<1x1x64xf32> to vector<1x64xf32>
    %54 = vector.broadcast %53 : vector<1x64xf32> to vector<8x64xf32>
    %55 = arith.addf %51, %54 : vector<8x64xf32>
    %c7_41 = arith.constant 7 : index
    %c0_42 = arith.constant 0 : index
    %56 = vector.load %arg18[%c7_41, %c0_42] : memref<24x32xbf16, #tpu.memory_space<vmem>>, vector<8x32xbf16>
    %c0_43 = arith.constant 0 : index
    %c0_44 = arith.constant 0 : index
    %c0_45 = arith.constant 0 : index
    %57 = vector.load %arg7[%c0_43, %c0_44, %c0_45] : memref<6x32x64xbf16, #tpu.memory_space<vmem>>, vector<1x32x64xbf16>
    %58 = vector.shape_cast %57 : vector<1x32x64xbf16> to vector<32x64xbf16>
    %cst_46 = arith.constant dense<0.000000e+00> : vector<8x64xf32>
    %59 = tpu.matmul %56, %58, %cst_46 {dimension_numbers = #tpu.dot_dimension_numbers<[1], [0], [0], [1], [0, 0, 1, 1], [], []>} : vector<8x32xbf16>, vector<32x64xbf16>, vector<8x64xf32> -> vector<8x64xf32>
    %60 = arith.addf %55, %59 : vector<8x64xf32>
    %c8_47 = arith.constant 8 : index
    %c0_48 = arith.constant 0 : index
    %61 = vector.load %arg18[%c8_47, %c0_48] : memref<24x32xbf16, #tpu.memory_space<vmem>>, vector<8x32xbf16>
    %c1_49 = arith.constant 1 : index
    %c0_50 = arith.constant 0 : index
    %c0_51 = arith.constant 0 : index
    %62 = vector.load %arg7[%c1_49, %c0_50, %c0_51] : memref<6x32x64xbf16, #tpu.memory_space<vmem>>, vector<1x32x64xbf16>
    %63 = vector.shape_cast %62 : vector<1x32x64xbf16> to vector<32x64xbf16>
    %cst_52 = arith.constant dense<0.000000e+00> : vector<8x64xf32>
    %64 = tpu.matmul %61, %63, %cst_52 {dimension_numbers = #tpu.dot_dimension_numbers<[1], [0], [0], [1], [0, 0, 1, 1], [], []>} : vector<8x32xbf16>, vector<32x64xbf16>, vector<8x64xf32> -> vector<8x64xf32>
    %65 = arith.addf %60, %64 : vector<8x64xf32>
    %c9_53 = arith.constant 9 : index
    %c0_54 = arith.constant 0 : index
    %66 = vector.load %arg18[%c9_53, %c0_54] : memref<24x32xbf16, #tpu.memory_space<vmem>>, vector<8x32xbf16>
    %c2_55 = arith.constant 2 : index
    %c0_56 = arith.constant 0 : index
    %c0_57 = arith.constant 0 : index
    %67 = vector.load %arg7[%c2_55, %c0_56, %c0_57] : memref<6x32x64xbf16, #tpu.memory_space<vmem>>, vector<1x32x64xbf16>
    %68 = vector.shape_cast %67 : vector<1x32x64xbf16> to vector<32x64xbf16>
    %cst_58 = arith.constant dense<0.000000e+00> : vector<8x64xf32>
    %69 = tpu.matmul %66, %68, %cst_58 {dimension_numbers = #tpu.dot_dimension_numbers<[1], [0], [0], [1], [0, 0, 1, 1], [], []>} : vector<8x32xbf16>, vector<32x64xbf16>, vector<8x64xf32> -> vector<8x64xf32>
    %70 = arith.addf %65, %69 : vector<8x64xf32>
    %71 = vector.extract_strided_slice %70 {offsets = [0, 0], sizes = [8, 32], strides = [1, 1]} : vector<8x64xf32> to vector<8x32xf32>
    %72 = math.tanh %71 : vector<8x32xf32>
    %73 = vector.extract_strided_slice %70 {offsets = [0, 32], sizes = [8, 32], strides = [1, 1]} : vector<8x64xf32> to vector<8x32xf32>
    %74 = arith.negf %73 : vector<8x32xf32>
    %75 = math.exp %74 : vector<8x32xf32>
    %cst_59 = arith.constant 1.000000e+00 : f32
    %76 = vector.broadcast %cst_59 : f32 to vector<8x32xf32>
    %77 = arith.addf %76, %75 : vector<8x32xf32>
    %78 = arith.divf %76, %77 : vector<8x32xf32>
    %79 = arith.mulf %72, %78 : vector<8x32xf32>
    %80 = arith.truncf %79 : vector<8x32xf32> to vector<8x32xbf16>
    %c0_60 = arith.constant 0 : index
    %c0_61 = arith.constant 0 : index
    %c0_62 = arith.constant 0 : index
    %81 = vector.load %arg10[%c0_60, %c0_61, %c0_62] : memref<2x32x64xbf16, #tpu.memory_space<vmem>>, vector<1x32x64xbf16>
    %82 = vector.shape_cast %81 : vector<1x32x64xbf16> to vector<32x64xbf16>
    %cst_63 = arith.constant dense<0.000000e+00> : vector<8x64xf32>
    %83 = tpu.matmul %80, %82, %cst_63 {dimension_numbers = #tpu.dot_dimension_numbers<[1], [0], [0], [1], [0, 0, 1, 1], [], []>} : vector<8x32xbf16>, vector<32x64xbf16>, vector<8x64xf32> -> vector<8x64xf32>
    %c0_64 = arith.constant 0 : index
    %c0_65 = arith.constant 0 : index
    %c0_66 = arith.constant 0 : index
    %84 = vector.load %arg11[%c0_64, %c0_65, %c0_66] : memref<2x1x64xf32, #tpu.memory_space<vmem>>, vector<1x1x64xf32>
    %85 = vector.shape_cast %84 : vector<1x1x64xf32> to vector<1x64xf32>
    %86 = vector.broadcast %85 : vector<1x64xf32> to vector<8x64xf32>
    %87 = arith.addf %83, %86 : vector<8x64xf32>
    %88 = vector.extract_strided_slice %87 {offsets = [0, 0], sizes = [8, 32], strides = [1, 1]} : vector<8x64xf32> to vector<8x32xf32>
    %89 = arith.addf %45, %88 : vector<8x32xf32>
    %cst_67 = arith.constant 0.707106769 : f32
    %90 = vector.broadcast %cst_67 : f32 to vector<8x32xf32>
    %91 = arith.mulf %89, %90 : vector<8x32xf32>
    %92 = vector.extract_strided_slice %87 {offsets = [0, 32], sizes = [8, 32], strides = [1, 1]} : vector<8x64xf32> to vector<8x32xf32>
    %93 = arith.addf %46, %92 : vector<8x32xf32>
    %94 = arith.truncf %91 : vector<8x32xf32> to vector<8x32xbf16>
    %c8_68 = arith.constant 8 : index
    %c0_69 = arith.constant 0 : index
    %95 = vector.load %arg18[%c8_68, %c0_69] : memref<24x32xbf16, #tpu.memory_space<vmem>>, vector<8x32xbf16>
    tpu.vector_store %arg18[%c8_68, %c0_69], %94 {strides = array<i32>} : memref<24x32xbf16, #tpu.memory_space<vmem>>, vector<8x32xbf16>,
    %c1_70 = arith.constant 1 : index
    %c0_71 = arith.constant 0 : index
    %c0_72 = arith.constant 0 : index
    %96 = vector.load %arg8[%c1_70, %c0_71, %c0_72] : memref<2x4x64xbf16, #tpu.memory_space<vmem>>, vector<1x4x64xbf16>
    %97 = vector.shape_cast %96 : vector<1x4x64xbf16> to vector<4x64xbf16>
    %cst_73 = arith.constant dense<0.000000e+00> : vector<8x64xf32>
    %98 = tpu.matmul %20, %97, %cst_73 {dimension_numbers = #tpu.dot_dimension_numbers<[1], [0], [0], [1], [0, 0, 1, 1], [], []>} : vector<8x4xbf16>, vector<4x64xbf16>, vector<8x64xf32> -> vector<8x64xf32>
    %c1_74 = arith.constant 1 : index
    %c0_75 = arith.constant 0 : index
    %c0_76 = arith.constant 0 : index
    %99 = vector.load %arg9[%c1_74, %c0_75, %c0_76] : memref<2x1x64xf32, #tpu.memory_space<vmem>>, vector<1x1x64xf32>
    %100 = vector.shape_cast %99 : vector<1x1x64xf32> to vector<1x64xf32>
    %101 = vector.broadcast %100 : vector<1x64xf32> to vector<8x64xf32>
    %102 = arith.addf %98, %101 : vector<8x64xf32>
    %c6 = arith.constant 6 : index
    %c0_77 = arith.constant 0 : index
    %103 = vector.load %arg18[%c6, %c0_77] : memref<24x32xbf16, #tpu.memory_space<vmem>>, vector<8x32xbf16>
    %c3 = arith.constant 3 : index
    %c0_78 = arith.constant 0 : index
    %c0_79 = arith.constant 0 : index
    %104 = vector.load %arg7[%c3, %c0_78, %c0_79] : memref<6x32x64xbf16, #tpu.memory_space<vmem>>, vector<1x32x64xbf16>
    %105 = vector.shape_cast %104 : vector<1x32x64xbf16> to vector<32x64xbf16>
    %cst_80 = arith.constant dense<0.000000e+00> : vector<8x64xf32>
    %106 = tpu.matmul %103, %105, %cst_80 {dimension_numbers = #tpu.dot_dimension_numbers<[1], [0], [0], [1], [0, 0, 1, 1], [], []>} : vector<8x32xbf16>, vector<32x64xbf16>, vector<8x64xf32> -> vector<8x64xf32>
    %107 = arith.addf %102, %106 : vector<8x64xf32>
    %c8_81 = arith.constant 8 : index
    %c0_82 = arith.constant 0 : index
    %108 = vector.load %arg18[%c8_81, %c0_82] : memref<24x32xbf16, #tpu.memory_space<vmem>>, vector<8x32xbf16>
    %c4 = arith.constant 4 : index
    %c0_83 = arith.constant 0 : index
    %c0_84 = arith.constant 0 : index
    %109 = vector.load %arg7[%c4, %c0_83, %c0_84] : memref<6x32x64xbf16, #tpu.memory_space<vmem>>, vector<1x32x64xbf16>
    %110 = vector.shape_cast %109 : vector<1x32x64xbf16> to vector<32x64xbf16>
    %cst_85 = arith.constant dense<0.000000e+00> : vector<8x64xf32>
    %111 = tpu.matmul %108, %110, %cst_85 {dimension_numbers = #tpu.dot_dimension_numbers<[1], [0], [0], [1], [0, 0, 1, 1], [], []>} : vector<8x32xbf16>, vector<32x64xbf16>, vector<8x64xf32> -> vector<8x64xf32>
    %112 = arith.addf %107, %111 : vector<8x64xf32>
    %c10 = arith.constant 10 : index
    %c0_86 = arith.constant 0 : index
    %113 = vector.load %arg18[%c10, %c0_86] : memref<24x32xbf16, #tpu.memory_space<vmem>>, vector<8x32xbf16>
    %c5 = arith.constant 5 : index
    %c0_87 = arith.constant 0 : index
    %c0_88 = arith.constant 0 : index
    %114 = vector.load %arg7[%c5, %c0_87, %c0_88] : memref<6x32x64xbf16, #tpu.memory_space<vmem>>, vector<1x32x64xbf16>
    %115 = vector.shape_cast %114 : vector<1x32x64xbf16> to vector<32x64xbf16>
    %cst_89 = arith.constant dense<0.000000e+00> : vector<8x64xf32>
    %116 = tpu.matmul %113, %115, %cst_89 {dimension_numbers = #tpu.dot_dimension_numbers<[1], [0], [0], [1], [0, 0, 1, 1], [], []>} : vector<8x32xbf16>, vector<32x64xbf16>, vector<8x64xf32> -> vector<8x64xf32>
    %117 = arith.addf %112, %116 : vector<8x64xf32>
    %118 = vector.extract_strided_slice %117 {offsets = [0, 0], sizes = [8, 32], strides = [1, 1]} : vector<8x64xf32> to vector<8x32xf32>
    %119 = math.tanh %118 : vector<8x32xf32>
    %120 = vector.extract_strided_slice %117 {offsets = [0, 32], sizes = [8, 32], strides = [1, 1]} : vector<8x64xf32> to vector<8x32xf32>
    %121 = arith.negf %120 : vector<8x32xf32>
    %122 = math.exp %121 : vector<8x32xf32>
    %cst_90 = arith.constant 1.000000e+00 : f32
    %123 = vector.broadcast %cst_90 : f32 to vector<8x32xf32>
    %124 = arith.addf %123, %122 : vector<8x32xf32>
    %125 = arith.divf %123, %124 : vector<8x32xf32>
    %126 = arith.mulf %119, %125 : vector<8x32xf32>
    %127 = arith.truncf %126 : vector<8x32xf32> to vector<8x32xbf16>
    %c1_91 = arith.constant 1 : index
    %c0_92 = arith.constant 0 : index
    %c0_93 = arith.constant 0 : index
    %128 = vector.load %arg10[%c1_91, %c0_92, %c0_93] : memref<2x32x64xbf16, #tpu.memory_space<vmem>>, vector<1x32x64xbf16>
    %129 = vector.shape_cast %128 : vector<1x32x64xbf16> to vector<32x64xbf16>
    %cst_94 = arith.constant dense<0.000000e+00> : vector<8x64xf32>
    %130 = tpu.matmul %127, %129, %cst_94 {dimension_numbers = #tpu.dot_dimension_numbers<[1], [0], [0], [1], [0, 0, 1, 1], [], []>} : vector<8x32xbf16>, vector<32x64xbf16>, vector<8x64xf32> -> vector<8x64xf32>
    %c1_95 = arith.constant 1 : index
    %c0_96 = arith.constant 0 : index
    %c0_97 = arith.constant 0 : index
    %131 = vector.load %arg11[%c1_95, %c0_96, %c0_97] : memref<2x1x64xf32, #tpu.memory_space<vmem>>, vector<1x1x64xf32>
    %132 = vector.shape_cast %131 : vector<1x1x64xf32> to vector<1x64xf32>
    %133 = vector.broadcast %132 : vector<1x64xf32> to vector<8x64xf32>
    %134 = arith.addf %130, %133 : vector<8x64xf32>
    %135 = vector.extract_strided_slice %134 {offsets = [0, 32], sizes = [8, 32], strides = [1, 1]} : vector<8x64xf32> to vector<8x32xf32>
    %136 = arith.addf %93, %135 : vector<8x32xf32>
    %cst_98 = arith.constant 0.000000e+00 : f32
    %137 = vector.broadcast %cst_98 : f32 to vector<8x32xf32>
    %138 = arith.maximumf %136, %137 : vector<8x32xf32>
    %139 = arith.truncf %138 : vector<8x32xf32> to vector<8x32xbf16>
    %c0_99 = arith.constant 0 : index
    %c0_100 = arith.constant 0 : index
    %140 = vector.load %arg12[%c0_99, %c0_100] : memref<32x32xbf16, #tpu.memory_space<vmem>>, vector<32x32xbf16>
    %cst_101 = arith.constant dense<0.000000e+00> : vector<8x32xf32>
    %141 = tpu.matmul %139, %140, %cst_101 {dimension_numbers = #tpu.dot_dimension_numbers<[1], [0], [0], [1], [0, 0, 1, 1], [], []>} : vector<8x32xbf16>, vector<32x32xbf16>, vector<8x32xf32> -> vector<8x32xf32>
    %c0_102 = arith.constant 0 : index
    %c0_103 = arith.constant 0 : index
    %142 = vector.load %arg13[%c0_102, %c0_103] : memref<1x32xf32, #tpu.memory_space<vmem>>, vector<1x32xf32>
    %143 = vector.broadcast %142 : vector<1x32xf32> to vector<8x32xf32>
    %144 = arith.addf %141, %143 : vector<8x32xf32>
    %cst_104 = arith.constant 0.000000e+00 : f32
    %145 = vector.broadcast %cst_104 : f32 to vector<8x32xf32>
    %146 = arith.maximumf %144, %145 : vector<8x32xf32>
    %147 = arith.truncf %146 : vector<8x32xf32> to vector<8x32xbf16>
    %c0_105 = arith.constant 0 : index
    %c0_106 = arith.constant 0 : index
    %148 = vector.load %arg14[%c0_105, %c0_106] : memref<32x8xbf16, #tpu.memory_space<vmem>>, vector<32x8xbf16>
    %cst_107 = arith.constant dense<0.000000e+00> : vector<8x8xf32>
    %149 = tpu.matmul %147, %148, %cst_107 {dimension_numbers = #tpu.dot_dimension_numbers<[1], [0], [0], [1], [0, 0, 1, 1], [], []>} : vector<8x32xbf16>, vector<32x8xbf16>, vector<8x8xf32> -> vector<8x8xf32>
    %c0_108 = arith.constant 0 : index
    %c0_109 = arith.constant 0 : index
    %150 = vector.load %arg15[%c0_108, %c0_109] : memref<1x8xf32, #tpu.memory_space<vmem>>, vector<1x8xf32>
    %151 = vector.broadcast %150 : vector<1x8xf32> to vector<8x8xf32>
    %152 = arith.addf %149, %151 : vector<8x8xf32>
    %153 = vector.extract_strided_slice %152 {offsets = [0, 0], sizes = [8, 4], strides = [1, 1]} : vector<8x8xf32> to vector<8x4xf32>
    %cst_110 = arith.constant 0.000000e+00 : f32
    %154 = vector.broadcast %cst_110 : f32 to vector<8x4xf32>
    %155 = arith.subf %154, %153 : vector<8x4xf32>
    %156 = vector.extract_strided_slice %152 {offsets = [0, 4], sizes = [8, 4], strides = [1, 1]} : vector<8x8xf32> to vector<8x4xf32>
    %157 = arith.subf %17, %156 : vector<8x4xf32>
    %158 = math.exp %155 : vector<8x4xf32>
    %159 = arith.mulf %157, %158 : vector<8x4xf32>
    %160 = tpu.concatenate %159, %10 in 1 : vector<8x4xf32>, vector<8x4xf32> -> vector<8x8xf32>
    %c0_111 = arith.constant 0 : index
    %c0_112 = arith.constant 0 : index
    %c0_113 = arith.constant 0 : index
    %161 = vector.load %arg16[%c0_111, %c0_112, %c0_113] : memref<1x8x8xf32, #tpu.memory_space<vmem>>, vector<1x8x8xf32>
    %162 = vector.shape_cast %161 : vector<1x8x8xf32> to vector<8x8xf32>
    %163 = vector.shape_cast %160 : vector<8x8xf32> to vector<1x8x8xf32>
    tpu.vector_store %arg16[%c0_111, %c0_112, %c0_113], %163 {strides = array<i32>} : memref<1x8x8xf32, #tpu.memory_space<vmem>>, vector<1x8x8xf32>,
    %cst_114 = arith.constant dense<0.000000e+00> : vector<4xf32>
    %164 = vector.multi_reduction <add>, %155, %cst_114 [0] : vector<8x4xf32> to vector<4xf32>
    %165 = vector.shape_cast %164 : vector<4xf32> to vector<1x4xf32>
    %cst_115 = arith.constant dense<0.000000e+00> : vector<1xf32>
    %166 = vector.multi_reduction <add>, %165, %cst_115 [1] : vector<1x4xf32> to vector<1xf32>
    %167 = vector.shape_cast %166 : vector<1xf32> to vector<1x1xf32>
    %c0_116 = arith.constant 0 : index
    %c0_117 = arith.constant 0 : index
    %c0_118 = arith.constant 0 : index
    %168 = vector.load %arg17[%c0_116, %c0_117, %c0_118] : memref<1x1x1xf32, #tpu.memory_space<vmem>>, vector<1x1x1xf32>
    %169 = vector.shape_cast %168 : vector<1x1x1xf32> to vector<1x1xf32>
    %170 = vector.shape_cast %167 : vector<1x1xf32> to vector<1x1x1xf32>
    tpu.vector_store %arg17[%c0_116, %c0_117, %c0_118], %170 {strides = array<i32>} : memref<1x1x1xf32, #tpu.memory_space<vmem>>, vector<1x1x1xf32>,
    return
  }
  func.func @transform_0(%arg0: i32) -> (i32, i32, i32) {
    %c0_i32 = arith.constant 0 : i32
    %c0_i32_0 = arith.constant 0 : i32
    %c0_i32_1 = arith.constant 0 : i32
    return %arg0, %c0_i32, %c0_i32_0 : i32, i32, i32
  }
  func.func @transform_1(%arg0: i32) -> (i32, i32, i32) {
    %c0_i32 = arith.constant 0 : i32
    %c0_i32_0 = arith.constant 0 : i32
    %c0_i32_1 = arith.constant 0 : i32
    return %arg0, %c0_i32, %c0_i32_0 : i32, i32, i32
  }
  func.func @transform_2(%arg0: i32) -> (i32, i32) {
    %c0_i32 = arith.constant 0 : i32
    %c0_i32_0 = arith.constant 0 : i32
    %c0_i32_1 = arith.constant 0 : i32
    return %c0_i32, %c0_i32_0 : i32, i32
  }
  func.func @transform_3(%arg0: i32) -> (i32, i32) {
    %c0_i32 = arith.constant 0 : i32
    %c0_i32_0 = arith.constant 0 : i32
    %c0_i32_1 = arith.constant 0 : i32
    return %c0_i32, %c0_i32_0 : i32, i32
  }
  func.func @transform_4(%arg0: i32) -> (i32, i32, i32) {
    %c0_i32 = arith.constant 0 : i32
    %c0_i32_0 = arith.constant 0 : i32
    %c0_i32_1 = arith.constant 0 : i32
    %c0_i32_2 = arith.constant 0 : i32
    return %c0_i32, %c0_i32_0, %c0_i32_1 : i32, i32, i32
  }
  func.func @transform_5(%arg0: i32) -> (i32, i32) {
    %c0_i32 = arith.constant 0 : i32
    %c0_i32_0 = arith.constant 0 : i32
    %c0_i32_1 = arith.constant 0 : i32
    return %c0_i32, %c0_i32_0 : i32, i32
  }
  func.func @transform_6(%arg0: i32) -> (i32, i32, i32) {
    %c0_i32 = arith.constant 0 : i32
    %c0_i32_0 = arith.constant 0 : i32
    %c0_i32_1 = arith.constant 0 : i32
    %c0_i32_2 = arith.constant 0 : i32
    return %c0_i32, %c0_i32_0, %c0_i32_1 : i32, i32, i32
  }
  func.func @transform_7(%arg0: i32) -> (i32, i32, i32) {
    %c0_i32 = arith.constant 0 : i32
    %c0_i32_0 = arith.constant 0 : i32
    %c0_i32_1 = arith.constant 0 : i32
    %c0_i32_2 = arith.constant 0 : i32
    return %c0_i32, %c0_i32_0, %c0_i32_1 : i32, i32, i32
  }
  func.func @transform_8(%arg0: i32) -> (i32, i32, i32) {
    %c0_i32 = arith.constant 0 : i32
    %c0_i32_0 = arith.constant 0 : i32
    %c0_i32_1 = arith.constant 0 : i32
    %c0_i32_2 = arith.constant 0 : i32
    return %c0_i32, %c0_i32_0, %c0_i32_1 : i32, i32, i32
  }
  func.func @transform_9(%arg0: i32) -> (i32, i32, i32) {
    %c0_i32 = arith.constant 0 : i32
    %c0_i32_0 = arith.constant 0 : i32
    %c0_i32_1 = arith.constant 0 : i32
    %c0_i32_2 = arith.constant 0 : i32
    return %c0_i32, %c0_i32_0, %c0_i32_1 : i32, i32, i32
  }
  func.func @transform_10(%arg0: i32) -> (i32, i32, i32) {
    %c0_i32 = arith.constant 0 : i32
    %c0_i32_0 = arith.constant 0 : i32
    %c0_i32_1 = arith.constant 0 : i32
    %c0_i32_2 = arith.constant 0 : i32
    return %c0_i32, %c0_i32_0, %c0_i32_1 : i32, i32, i32
  }
  func.func @transform_11(%arg0: i32) -> (i32, i32) {
    %c0_i32 = arith.constant 0 : i32
    %c0_i32_0 = arith.constant 0 : i32
    %c0_i32_1 = arith.constant 0 : i32
    return %c0_i32, %c0_i32_0 : i32, i32
  }
  func.func @transform_12(%arg0: i32) -> (i32, i32) {
    %c0_i32 = arith.constant 0 : i32
    %c0_i32_0 = arith.constant 0 : i32
    %c0_i32_1 = arith.constant 0 : i32
    return %c0_i32, %c0_i32_0 : i32, i32
  }
  func.func @transform_13(%arg0: i32) -> (i32, i32) {
    %c0_i32 = arith.constant 0 : i32
    %c0_i32_0 = arith.constant 0 : i32
    %c0_i32_1 = arith.constant 0 : i32
    return %c0_i32, %c0_i32_0 : i32, i32
  }
  func.func @transform_14(%arg0: i32) -> (i32, i32) {
    %c0_i32 = arith.constant 0 : i32
    %c0_i32_0 = arith.constant 0 : i32
    %c0_i32_1 = arith.constant 0 : i32
    return %c0_i32, %c0_i32_0 : i32, i32
  }
  func.func @transform_15(%arg0: i32) -> (i32, i32, i32) {
    %c0_i32 = arith.constant 0 : i32
    %c0_i32_0 = arith.constant 0 : i32
    %c0_i32_1 = arith.constant 0 : i32
    return %arg0, %c0_i32, %c0_i32_0 : i32, i32, i32
  }
  func.func @transform_16(%arg0: i32) -> (i32, i32, i32) {
    %c0_i32 = arith.constant 0 : i32
    %c0_i32_0 = arith.constant 0 : i32
    %c0_i32_1 = arith.constant 0 : i32
    return %arg0, %c0_i32, %c0_i32_0 : i32, i32, i32
  }
}

</mosaic_0001>

<llo_original>
// kernel: tpu_custom_call.1
$region0: #{tpu_custom_call.1}
  #allocation0 [shape = 'u32[]', space=smem, size = 0x4, offset = 0x4, fixed_abs, tag = 'smem constant byte address 0x4 - core index']
  #allocation1 [shape = 'u32[144,128]{1,0:T(1,128)}', space=vmem, size = 0x12000, scoped, tag = 'internal scratch']
  #allocation2 [shape = 'bf16[24,32]{1,0:T(8,128)(2,1)}', space=vmem, size = 0x1800, scoped, tag = 'scratch operand']
  %s0 = inlined_call_operand.hbm [shape: f32[2,8,8], index: 0, kind: input, shape index: {}]
  %s1 = inlined_call_operand.vmem [shape: f32[2,8,4], index: 1, kind: input, shape index: {}]
  %s2 = inlined_call_operand.hbm [shape: f32[1,8], index: 2, kind: input, shape index: {}]
  %s3 = inlined_call_operand.hbm [shape: f32[1,8], index: 3, kind: input, shape index: {}]
  %s4 = inlined_call_operand.vmem [shape: bf16[3,32,32], index: 4, kind: input, shape index: {}]
  %s5 = inlined_call_operand.hbm [shape: f32[1,32], index: 5, kind: input, shape index: {}]
  %s6 = inlined_call_operand.hbm [shape: bf16[6,32,64], index: 6, kind: input, shape index: {}]
  %s7 = inlined_call_operand.hbm [shape: bf16[2,4,64], index: 7, kind: input, shape index: {}]
  %s8 = inlined_call_operand.hbm [shape: f32[2,1,64], index: 8, kind: input, shape index: {}]
  %s9 = inlined_call_operand.hbm [shape: bf16[2,32,64], index: 9, kind: input, shape index: {}]
  %s10 = inlined_call_operand.hbm [shape: f32[2,1,64], index: 10, kind: input, shape index: {}]
  %s11 = inlined_call_operand.vmem [shape: bf16[32,32], index: 11, kind: input, shape index: {}]
  %s12 = inlined_call_operand.vmem [shape: f32[1,32], index: 12, kind: input, shape index: {}]
  %s13 = inlined_call_operand.vmem [shape: bf16[32,8], index: 13, kind: input, shape index: {}]
  %s14 = inlined_call_operand.vmem [shape: f32[1,8], index: 14, kind: input, shape index: {}]
  %s15 = inlined_call_operand.hbm [shape: f32[2,8,8], index: 15, kind: output, shape index: {0}]
  %s16 = inlined_call_operand.vmem [shape: f32[2,1,1], index: 16, kind: output, shape index: {1}]
  %17 = xla_tuple %s15, %s16
  %s18 = sld [smem:[#allocation0]]
  $region137: #{tpu_custom_call.1} parent=0
    _
  %s20 = ssub.s32 1, %s18
  %s21 = scalar_select 0, %s20, %s18
  $region1: #{tpu_custom_call.1} parent=0
    #allocation3 [shape = 'u8[8192]{0}', space=vmem, size = 0x2000, scoped, tag = 'input window, operand 0']
    #allocation4 [shape = 's32[2]{0}', space=sflag, size = 0x8, scoped, tag = 'scoped memory for tpu_custom_call.1']
    #allocation5 [shape = 's32[2]{0}', space=sflag, size = 0x8, scoped, tag = 'scoped memory for tpu_custom_call.1']
    #allocation6 [shape = 'u8[512]{0}', space=vmem, size = 0x400, scoped, tag = 'input window, operand 2, single buffered']
    #allocation7 [shape = 's32[1]{0}', space=sflag, size = 0x4, scoped, tag = 'scoped memory for tpu_custom_call.1']
    #allocation8 [shape = 'u8[512]{0}', space=vmem, size = 0x400, scoped, tag = 'input window, operand 3, single buffered']
    #allocation9 [shape = 'u8[512]{0}', space=vmem, size = 0x400, scoped, tag = 'input window, operand 5, single buffered']
    #allocation10 [shape = 's32[1]{0}', space=sflag, size = 0x4, scoped, tag = 'scoped memory for tpu_custom_call.1']
    #allocation11 [shape = 'u8[49152]{0}', space=vmem, size = 0xc000, scoped, tag = 'input window, operand 6, single buffered']
    #allocation12 [shape = 'u8[2048]{0}', space=vmem, size = 0x800, scoped, tag = 'input window, operand 7, single buffered']
    #allocation13 [shape = 's32[1]{0}', space=sflag, size = 0x4, scoped, tag = 'scoped memory for tpu_custom_call.1']
    #allocation14 [shape = 'u8[1024]{0}', space=vmem, size = 0x400, scoped, tag = 'input window, operand 8, single buffered']
    #allocation15 [shape = 'u8[16384]{0}', space=vmem, size = 0x4000, scoped, tag = 'input window, operand 9, single buffered']
    #allocation16 [shape = 's32[1]{0}', space=sflag, size = 0x4, scoped, tag = 'scoped memory for tpu_custom_call.1']
    #allocation17 [shape = 'u8[1024]{0}', space=vmem, size = 0x400, scoped, tag = 'input window, operand 10, single buffered']
    #allocation18 [shape = 'u8[8192]{0}', space=vmem, size = 0x2000, scoped, tag = 'output window, operand 0']
    %22 = vsyncpa [#allocation4], 0
    %s23 = scalar_lea.sflag [#allocation4], 1
    %24 = vsyncpa %s23, 0
    %25 = vsyncpa [#allocation7], 0
    %26 = vsyncpa [#allocation10], 0
    %27 = vsyncpa [#allocation13], 0
    %28 = vsyncpa [#allocation16], 0
    %29 = vsyncpa [#allocation5], 0
    %s30 = scalar_lea.sflag [#allocation5], 1
    %31 = vsyncpa %s30, 0
    loop: start=0, step=1, limit=4
    $region2: #{tpu_custom_call.1} parent=1 // loop_pre_header
      _
    $region3: #{tpu_custom_call.1} parent=1 // loop_header
      %s33 = sphi 0, %s37
      %p34 = scmp.ge.s32.totalorder %s33, 4
      %s43 = sphi 0, %s45
      %s46 = sphi 0, %s43
      %s47 = sphi 0, %s46
      %s63 = sphi 0, %s47
      %s69 = sphi 0, %s71
      %s72 = sphi 0, %s69
      %s73 = sphi 0, %s72
      %s89 = sphi 0, %s73
      %s93 = sphi 0, %s93
      %s95 = sphi 0, %s93
      %s96 = sphi 0, %s95
      %s110 = sphi 0, %s96
      %s114 = sphi 0, %s114
      %s116 = sphi 0, %s114
      %s117 = sphi 0, %s116
      %s131 = sphi 0, %s117
      %s135 = sphi 0, %s135
      %s137 = sphi 0, %s135
      %s138 = sphi 0, %s137
      %s152 = sphi 0, %s138
      %s156 = sphi 0, %s156
      %s158 = sphi 0, %s156
      %s159 = sphi 0, %s158
      %s173 = sphi 0, %s159
      %s177 = sphi 0, %s177
      %s179 = sphi 0, %s177
      %s180 = sphi 0, %s179
      %s194 = sphi 0, %s180
      %s198 = sphi 0, %s198
      %s200 = sphi 0, %s198
      %s201 = sphi 0, %s200
      %s215 = sphi 0, %s201
      %s219 = sphi 0, %s219
      %s221 = sphi 0, %s219
      %s222 = sphi 0, %s221
      %s236 = sphi 0, %s222
      %s240 = sphi 0, %s240
      %s242 = sphi 0, %s240
      %s243 = sphi 0, %s242
      %s257 = sphi 0, %s243
      %s261 = sphi 0, %s261
      %s263 = sphi 0, %s261
      %s264 = sphi 0, %s263
      %s278 = sphi 0, %s264
      %s282 = sphi 0, %s282
      %s284 = sphi 0, %s282
      %s285 = sphi 0, %s284
      %s299 = sphi 0, %s285
      %s303 = sphi 0, %s303
      %s305 = sphi 0, %s303
      %s306 = sphi 0, %s305
      %s320 = sphi 0, %s306
      %s324 = sphi 0, %s324
      %s326 = sphi 0, %s324
      %s327 = sphi 0, %s326
      %s341 = sphi 0, %s327
      %s345 = sphi 0, %s345
      %s347 = sphi 0, %s345
      %s348 = sphi 0, %s347
      %s362 = sphi 0, %s348
      %s368 = sphi 0, %s370
      %s371 = sphi 0, %s368
      %s372 = sphi 0, %s371
      %s388 = sphi 0, %s372
      %s394 = sphi 0, %s396
      %s397 = sphi 0, %s394
      %s398 = sphi 0, %s397
      %s414 = sphi 0, %s398
    $region4: #{tpu_custom_call.1} parent=1 // loop_header_branch
      %36 = sbr.rel (%p34) target = $region8
    $region5: #{tpu_custom_call.1} parent=1 // loop_body
      %s38 = ssub.s32 %s33, 1
      %s39 = ssub.s32 %s33, 2
      %s40 = sadd.s32 %s33, 1
      %s41 = ssub.s32 %s33, %s40
      %p42 = scmp.eq.s32.totalorder %s41, 0
      %s44 = sadd.s32 %s43, 1
      %s45 = scalar_select %p42, %s43, %s44
      %p48 = pneg %p42
      %p49 = scmp.eq.s32.totalorder %s33, 1
      %p50 = por %p48, %p49
      %p51 = scmp.ne.s32.totalorder %s43, %s46
      %p52 = scmp.eq.s32.totalorder %s33, 0
      %p53 = por %p51, %p52
      %p54 = scmp.ne.s32.totalorder %s43, %s46
      %p55 = scmp.eq.s32.totalorder %s38, 1
      %p56 = por %p54, %p55
      %p57 = scmp.ne.s32.totalorder %s46, %s47
      %p58 = scmp.eq.s32.totalorder %s38, 0
      %p59 = por %p57, %p58
      %p60 = scmp.ne.s32.totalorder %s46, %s47
      %p61 = scmp.eq.s32.totalorder %s39, 1
      %p62 = por %p60, %p61
      %p64 = scmp.ne.s32.totalorder %s47, %s63
      %p65 = scmp.eq.s32.totalorder %s39, 0
      %p66 = por %p64, %p65
      %s67 = ssub.s32 %s33, %s40
      %p68 = scmp.eq.s32.totalorder %s67, 0
      %s70 = sadd.s32 %s69, 1
      %s71 = scalar_select %p68, %s69, %s70
      %p74 = pneg %p68
      %p75 = scmp.eq.s32.totalorder %s33, 1
      %p76 = por %p74, %p75
      %p77 = scmp.ne.s32.totalorder %s69, %s72
      %p78 = scmp.eq.s32.totalorder %s33, 0
      %p79 = por %p77, %p78
      %p80 = scmp.ne.s32.totalorder %s69, %s72
      %p81 = scmp.eq.s32.totalorder %s38, 1
      %p82 = por %p80, %p81
      %p83 = scmp.ne.s32.totalorder %s72, %s73
      %p84 = scmp.eq.s32.totalorder %s38, 0
      %p85 = por %p83, %p84
      %p86 = scmp.ne.s32.totalorder %s72, %s73
      %p87 = scmp.eq.s32.totalorder %s39, 1
      %p88 = por %p86, %p87
      %p90 = scmp.ne.s32.totalorder %s73, %s89
      %p91 = scmp.eq.s32.totalorder %s39, 0
      %p92 = por %p90, %p91
      %s94 = sadd.s32 %s93, 1
      %p97 = scmp.eq.s32.totalorder %s33, 1
      %p98 = scmp.ne.s32.totalorder %s93, %s95
      %p99 = scmp.eq.s32.totalorder %s33, 0
      %p100 = por %p98, %p99
      %p101 = scmp.ne.s32.totalorder %s93, %s95
      %p102 = scmp.eq.s32.totalorder %s38, 1
      %p103 = por %p101, %p102
      %p104 = scmp.ne.s32.totalorder %s95, %s96
      %p105 = scmp.eq.s32.totalorder %s38, 0
      %p106 = por %p104, %p105
      %p107 = scmp.ne.s32.totalorder %s95, %s96
      %p108 = scmp.eq.s32.totalorder %s39, 1
      %p109 = por %p107, %p108
      %p111 = scmp.ne.s32.totalorder %s96, %s110
      %p112 = scmp.eq.s32.totalorder %s39, 0
      %p113 = por %p111, %p112
      %s115 = sadd.s32 %s114, 1
      %p118 = scmp.eq.s32.totalorder %s33, 1
      %p119 = scmp.ne.s32.totalorder %s114, %s116
      %p120 = scmp.eq.s32.totalorder %s33, 0
      %p121 = por %p119, %p120
      %p122 = scmp.ne.s32.totalorder %s114, %s116
      %p123 = scmp.eq.s32.totalorder %s38, 1
      %p124 = por %p122, %p123
      %p125 = scmp.ne.s32.totalorder %s116, %s117
      %p126 = scmp.eq.s32.totalorder %s38, 0
      %p127 = por %p125, %p126
      %p128 = scmp.ne.s32.totalorder %s116, %s117
      %p129 = scmp.eq.s32.totalorder %s39, 1
      %p130 = por %p128, %p129
      %p132 = scmp.ne.s32.totalorder %s117, %s131
      %p133 = scmp.eq.s32.totalorder %s39, 0
      %p134 = por %p132, %p133
      %s136 = sadd.s32 %s135, 1
      %p139 = scmp.eq.s32.totalorder %s33, 1
      %p140 = scmp.ne.s32.totalorder %s135, %s137
      %p141 = scmp.eq.s32.totalorder %s33, 0
      %p142 = por %p140, %p141
      %p143 = scmp.ne.s32.totalorder %s135, %s137
      %p144 = scmp.eq.s32.totalorder %s38, 1
      %p145 = por %p143, %p144
      %p146 = scmp.ne.s32.totalorder %s137, %s138
      %p147 = scmp.eq.s32.totalorder %s38, 0
      %p148 = por %p146, %p147
      %p149 = scmp.ne.s32.totalorder %s137, %s138
      %p150 = scmp.eq.s32.totalorder %s39, 1
      %p151 = por %p149, %p150
      %p153 = scmp.ne.s32.totalorder %s138, %s152
      %p154 = scmp.eq.s32.totalorder %s39, 0
      %p155 = por %p153, %p154
      %s157 = sadd.s32 %s156, 1
      %p160 = scmp.eq.s32.totalorder %s33, 1
      %p161 = scmp.ne.s32.totalorder %s156, %s158
      %p162 = scmp.eq.s32.totalorder %s33, 0
      %p163 = por %p161, %p162
      %p164 = scmp.ne.s32.totalorder %s156, %s158
      %p165 = scmp.eq.s32.totalorder %s38, 1
      %p166 = por %p164, %p165
      %p167 = scmp.ne.s32.totalorder %s158, %s159
      %p168 = scmp.eq.s32.totalorder %s38, 0
      %p169 = por %p167, %p168
      %p170 = scmp.ne.s32.totalorder %s158, %s159
      %p171 = scmp.eq.s32.totalorder %s39, 1
      %p172 = por %p170, %p171
      %p174 = scmp.ne.s32.totalorder %s159, %s173
      %p175 = scmp.eq.s32.totalorder %s39, 0
      %p176 = por %p174, %p175
      %s178 = sadd.s32 %s177, 1
      %p181 = scmp.eq.s32.totalorder %s33, 1
      %p182 = scmp.ne.s32.totalorder %s177, %s179
      %p183 = scmp.eq.s32.totalorder %s33, 0
      %p184 = por %p182, %p183
      %p185 = scmp.ne.s32.totalorder %s177, %s179
      %p186 = scmp.eq.s32.totalorder %s38, 1
      %p187 = por %p185, %p186
      %p188 = scmp.ne.s32.totalorder %s179, %s180
      %p189 = scmp.eq.s32.totalorder %s38, 0
      %p190 = por %p188, %p189
      %p191 = scmp.ne.s32.totalorder %s179, %s180
      %p192 = scmp.eq.s32.totalorder %s39, 1
      %p193 = por %p191, %p192
      %p195 = scmp.ne.s32.totalorder %s180, %s194
      %p196 = scmp.eq.s32.totalorder %s39, 0
      %p197 = por %p195, %p196
      %s199 = sadd.s32 %s198, 1
      %p202 = scmp.eq.s32.totalorder %s33, 1
      %p203 = scmp.ne.s32.totalorder %s198, %s200
      %p204 = scmp.eq.s32.totalorder %s33, 0
      %p205 = por %p203, %p204
      %p206 = scmp.ne.s32.totalorder %s198, %s200
      %p207 = scmp.eq.s32.totalorder %s38, 1
      %p208 = por %p206, %p207
      %p209 = scmp.ne.s32.totalorder %s200, %s201
      %p210 = scmp.eq.s32.totalorder %s38, 0
      %p211 = por %p209, %p210
      %p212 = scmp.ne.s32.totalorder %s200, %s201
      %p213 = scmp.eq.s32.totalorder %s39, 1
      %p214 = por %p212, %p213
      %p216 = scmp.ne.s32.totalorder %s201, %s215
      %p217 = scmp.eq.s32.totalorder %s39, 0
      %p218 = por %p216, %p217
      %s220 = sadd.s32 %s219, 1
      %p223 = scmp.eq.s32.totalorder %s33, 1
      %p224 = scmp.ne.s32.totalorder %s219, %s221
      %p225 = scmp.eq.s32.totalorder %s33, 0
      %p226 = por %p224, %p225
      %p227 = scmp.ne.s32.totalorder %s219, %s221
      %p228 = scmp.eq.s32.totalorder %s38, 1
      %p229 = por %p227, %p228
      %p230 = scmp.ne.s32.totalorder %s221, %s222
      %p231 = scmp.eq.s32.totalorder %s38, 0
      %p232 = por %p230, %p231
      %p233 = scmp.ne.s32.totalorder %s221, %s222
      %p234 = scmp.eq.s32.totalorder %s39, 1
      %p235 = por %p233, %p234
      %p237 = scmp.ne.s32.totalorder %s222, %s236
      %p238 = scmp.eq.s32.totalorder %s39, 0
      %p239 = por %p237, %p238
      %s241 = sadd.s32 %s240, 1
      %p244 = scmp.eq.s32.totalorder %s33, 1
      %p245 = scmp.ne.s32.totalorder %s240, %s242
      %p246 = scmp.eq.s32.totalorder %s33, 0
      %p247 = por %p245, %p246
      %p248 = scmp.ne.s32.totalorder %s240, %s242
      %p249 = scmp.eq.s32.totalorder %s38, 1
      %p250 = por %p248, %p249
      %p251 = scmp.ne.s32.totalorder %s242, %s243
      %p252 = scmp.eq.s32.totalorder %s38, 0
      %p253 = por %p251, %p252
      %p254 = scmp.ne.s32.totalorder %s242, %s243
      %p255 = scmp.eq.s32.totalorder %s39, 1
      %p256 = por %p254, %p255
      %p258 = scmp.ne.s32.totalorder %s243, %s257
      %p259 = scmp.eq.s32.totalorder %s39, 0
      %p260 = por %p258, %p259
      %s262 = sadd.s32 %s261, 1
      %p265 = scmp.eq.s32.totalorder %s33, 1
      %p266 = scmp.ne.s32.totalorder %s261, %s263
      %p267 = scmp.eq.s32.totalorder %s33, 0
      %p268 = por %p266, %p267
      %p269 = scmp.ne.s32.totalorder %s261, %s263
      %p270 = scmp.eq.s32.totalorder %s38, 1
      %p271 = por %p269, %p270
      %p272 = scmp.ne.s32.totalorder %s263, %s264
      %p273 = scmp.eq.s32.totalorder %s38, 0
      %p274 = por %p272, %p273
      %p275 = scmp.ne.s32.totalorder %s263, %s264
      %p276 = scmp.eq.s32.totalorder %s39, 1
      %p277 = por %p275, %p276
      %p279 = scmp.ne.s32.totalorder %s264, %s278
      %p280 = scmp.eq.s32.totalorder %s39, 0
      %p281 = por %p279, %p280
      %s283 = sadd.s32 %s282, 1
      %p286 = scmp.eq.s32.totalorder %s33, 1
      %p287 = scmp.ne.s32.totalorder %s282, %s284
      %p288 = scmp.eq.s32.totalorder %s33, 0
      %p289 = por %p287, %p288
      %p290 = scmp.ne.s32.totalorder %s282, %s284
      %p291 = scmp.eq.s32.totalorder %s38, 1
      %p292 = por %p290, %p291
      %p293 = scmp.ne.s32.totalorder %s284, %s285
      %p294 = scmp.eq.s32.totalorder %s38, 0
      %p295 = por %p293, %p294
      %p296 = scmp.ne.s32.totalorder %s284, %s285
      %p297 = scmp.eq.s32.totalorder %s39, 1
      %p298 = por %p296, %p297
      %p300 = scmp.ne.s32.totalorder %s285, %s299
      %p301 = scmp.eq.s32.totalorder %s39, 0
      %p302 = por %p300, %p301
      %s304 = sadd.s32 %s303, 1
      %p307 = scmp.eq.s32.totalorder %s33, 1
      %p308 = scmp.ne.s32.totalorder %s303, %s305
      %p309 = scmp.eq.s32.totalorder %s33, 0
      %p310 = por %p308, %p309
      %p311 = scmp.ne.s32.totalorder %s303, %s305
      %p312 = scmp.eq.s32.totalorder %s38, 1
      %p313 = por %p311, %p312
      %p314 = scmp.ne.s32.totalorder %s305, %s306
      %p315 = scmp.eq.s32.totalorder %s38, 0
      %p316 = por %p314, %p315
      %p317 = scmp.ne.s32.totalorder %s305, %s306
      %p318 = scmp.eq.s32.totalorder %s39, 1
      %p319 = por %p317, %p318
      %p321 = scmp.ne.s32.totalorder %s306, %s320
      %p322 = scmp.eq.s32.totalorder %s39, 0
      %p323 = por %p321, %p322
      %s325 = sadd.s32 %s324, 1
      %p328 = scmp.eq.s32.totalorder %s33, 1
      %p329 = scmp.ne.s32.totalorder %s324, %s326
      %p330 = scmp.eq.s32.totalorder %s33, 0
      %p331 = por %p329, %p330
      %p332 = scmp.ne.s32.totalorder %s324, %s326
      %p333 = scmp.eq.s32.totalorder %s38, 1
      %p334 = por %p332, %p333
      %p335 = scmp.ne.s32.totalorder %s326, %s327
      %p336 = scmp.eq.s32.totalorder %s38, 0
      %p337 = por %p335, %p336
      %p338 = scmp.ne.s32.totalorder %s326, %s327
      %p339 = scmp.eq.s32.totalorder %s39, 1
      %p340 = por %p338, %p339
      %p342 = scmp.ne.s32.totalorder %s327, %s341
      %p343 = scmp.eq.s32.totalorder %s39, 0
      %p344 = por %p342, %p343
      %s346 = sadd.s32 %s345, 1
      %p349 = scmp.eq.s32.totalorder %s33, 1
      %p350 = scmp.ne.s32.totalorder %s345, %s347
      %p351 = scmp.eq.s32.totalorder %s33, 0
      %p352 = por %p350, %p351
      %p353 = scmp.ne.s32.totalorder %s345, %s347
      %p354 = scmp.eq.s32.totalorder %s38, 1
      %p355 = por %p353, %p354
      %p356 = scmp.ne.s32.totalorder %s347, %s348
      %p357 = scmp.eq.s32.totalorder %s38, 0
      %p358 = por %p356, %p357
      %p359 = scmp.ne.s32.totalorder %s347, %s348
      %p360 = scmp.eq.s32.totalorder %s39, 1
      %p361 = por %p359, %p360
      %p363 = scmp.ne.s32.totalorder %s348, %s362
      %p364 = scmp.eq.s32.totalorder %s39, 0
      %p365 = por %p363, %p364
      %s366 = ssub.s32 %s33, %s40
      %p367 = scmp.eq.s32.totalorder %s366, 0
      %s369 = sadd.s32 %s368, 1
      %s370 = scalar_select %p367, %s368, %s369
      %p373 = pneg %p367
      %p374 = scmp.eq.s32.totalorder %s33, 1
      %p375 = por %p373, %p374
      %p376 = scmp.ne.s32.totalorder %s368, %s371
      %p377 = scmp.eq.s32.totalorder %s33, 0
      %p378 = por %p376, %p377
      %p379 = scmp.ne.s32.totalorder %s368, %s371
      %p380 = scmp.eq.s32.totalorder %s38, 1
      %p381 = por %p379, %p380
      %p382 = scmp.ne.s32.totalorder %s371, %s372
      %p383 = scmp.eq.s32.totalorder %s38, 0
      %p384 = por %p382, %p383
      %p385 = scmp.ne.s32.totalorder %s371, %s372
      %p386 = scmp.eq.s32.totalorder %s39, 1
      %p387 = por %p385, %p386
      %p389 = scmp.ne.s32.totalorder %s372, %s388
      %p390 = scmp.eq.s32.totalorder %s39, 0
      %p391 = por %p389, %p390
      %s392 = ssub.s32 %s33, %s40
      %p393 = scmp.eq.s32.totalorder %s392, 0
      %s395 = sadd.s32 %s394, 1
      %s396 = scalar_select %p393, %s394, %s395
      %p399 = pneg %p393
      %p400 = scmp.eq.s32.totalorder %s33, 1
      %p401 = por %p399, %p400
      %p402 = scmp.ne.s32.totalorder %s394, %s397
      %p403 = scmp.eq.s32.totalorder %s33, 0
      %p404 = por %p402, %p403
      %p405 = scmp.ne.s32.totalorder %s394, %s397
      %p406 = scmp.eq.s32.totalorder %s38, 1
      %p407 = por %p405, %p406
      %p408 = scmp.ne.s32.totalorder %s397, %s398
      %p409 = scmp.eq.s32.totalorder %s38, 0
      %p410 = por %p408, %p409
      %p411 = scmp.ne.s32.totalorder %s397, %s398
      %p412 = scmp.eq.s32.totalorder %s39, 1
      %p413 = por %p411, %p412
      %p415 = scmp.ne.s32.totalorder %s398, %s414
      %p416 = scmp.eq.s32.totalorder %s39, 0
      %p417 = por %p415, %p416
      %p418 = scmp.le.s32.totalorder 1, %s33
      %p419 = scmp.lt.s32.totalorder %s33, 3
      %p420 = pnand %p418, %p419
      %p421 = pneg %p420
      // Predicated region
      $region9: #{tpu_custom_call.1} parent=5 // pred_check
        _
      $region10: #{tpu_custom_call.1} parent=5 // pred_check_branch
        %423 = sbr.rel (%p420) target = $region12
      $region11: #{tpu_custom_call.1} parent=5 // pred_region
        %s424 = ssub.s32 %s33, 1
        // Predicated region
        $region13: #{tpu_custom_call.1} parent=11 // pred_check
          %p425 = pneg %p106
        $region14: #{tpu_custom_call.1} parent=11 // pred_check_branch
          %427 = sbr.rel (%p425) target = $region16
        $region15: #{tpu_custom_call.1} parent=11 // pred_region
          %s429 = ssub.s32 16, 16
          %430 = vsyncadd [#allocation7], %s429
          %s432 = sshll.u32 [#allocation6], 4
          %s433 = int_to_ptr.vmem [resolvable:$true] %s432
          %435 = dma.hbm_to_vmem [thread:$0]  %s2, 16, %s433, [#allocation7]
        $region16: #{tpu_custom_call.1} parent=11 // pred_fallthru
          _
        // Predicated region
        $region17: #{tpu_custom_call.1} parent=11 // pred_check
          %p436 = pneg %p127
        $region18: #{tpu_custom_call.1} parent=11 // pred_check_branch
          %438 = sbr.rel (%p436) target = $region20
        $region19: #{tpu_custom_call.1} parent=11 // pred_region
          %s440 = ssub.s32 16, 16
          %441 = vsyncadd [#allocation7], %s440
          %s443 = sshll.u32 [#allocation8], 4
          %s444 = int_to_ptr.vmem [resolvable:$true] %s443
          %446 = dma.hbm_to_vmem [thread:$0]  %s3, 16, %s444, [#allocation7]
        $region20: #{tpu_custom_call.1} parent=11 // pred_fallthru
          _
        // Predicated region
        $region21: #{tpu_custom_call.1} parent=11 // pred_check
          %p447 = pneg %p148
        $region22: #{tpu_custom_call.1} parent=11 // pred_check_branch
          %449 = sbr.rel (%p447) target = $region24
        $region23: #{tpu_custom_call.1} parent=11 // pred_region
          _
        $region24: #{tpu_custom_call.1} parent=11 // pred_fallthru
          _
        // Predicated region
        $region25: #{tpu_custom_call.1} parent=11 // pred_check
          %p450 = pneg %p169
        $region26: #{tpu_custom_call.1} parent=11 // pred_check_branch
          %452 = sbr.rel (%p450) target = $region28
        $region27: #{tpu_custom_call.1} parent=11 // pred_region
          %s454 = ssub.s32 16, 16
          %455 = vsyncadd [#allocation10], %s454
          %s457 = sshll.u32 [#allocation9], 4
          %s458 = int_to_ptr.vmem [resolvable:$true] %s457
          %460 = dma.hbm_to_vmem [thread:$0]  %s5, 16, %s458, [#allocation10]
        $region28: #{tpu_custom_call.1} parent=11 // pred_fallthru
          _
        // Predicated region
        $region29: #{tpu_custom_call.1} parent=11 // pred_check
          %p461 = pneg %p190
        $region30: #{tpu_custom_call.1} parent=11 // pred_check_branch
          %463 = sbr.rel (%p461) target = $region32
        $region31: #{tpu_custom_call.1} parent=11 // pred_region
          %s465 = ssub.s32 1536, 1536
          %466 = vsyncadd [#allocation10], %s465
          %s467 = sshll.u32 [#allocation11], 4
          %s468 = int_to_ptr.vmem [resolvable:$true] %s467
          %473 = dma.hbm_to_vmem [thread:$0]  %s6, 1536, %s468, [#allocation10], 64, 64, 4
        $region32: #{tpu_custom_call.1} parent=11 // pred_fallthru
          _
        // Predicated region
        $region33: #{tpu_custom_call.1} parent=11 // pred_check
          %p474 = pneg %p211
        $region34: #{tpu_custom_call.1} parent=11 // pred_check_branch
          %476 = sbr.rel (%p474) target = $region36
        $region35: #{tpu_custom_call.1} parent=11 // pred_region
          %s478 = ssub.s32 64, 64
          %479 = vsyncadd [#allocation13], %s478
          %s480 = sshll.u32 [#allocation12], 4
          %s481 = int_to_ptr.vmem [resolvable:$true] %s480
          %486 = dma.hbm_to_vmem [thread:$0]  %s7, 64, %s481, [#allocation13], 32, 32, 2
        $region36: #{tpu_custom_call.1} parent=11 // pred_fallthru
          _
        // Predicated region
        $region37: #{tpu_custom_call.1} parent=11 // pred_check
          %p487 = pneg %p232
        $region38: #{tpu_custom_call.1} parent=11 // pred_check_branch
          %489 = sbr.rel (%p487) target = $region40
        $region39: #{tpu_custom_call.1} parent=11 // pred_region
          %s491 = ssub.s32 32, 32
          %492 = vsyncadd [#allocation13], %s491
          %s493 = sshll.u32 [#allocation14], 4
          %s494 = int_to_ptr.vmem [resolvable:$true] %s493
          %499 = dma.hbm_to_vmem [thread:$0]  %s8, 32, %s494, [#allocation13], 16, 16, 1
        $region40: #{tpu_custom_call.1} parent=11 // pred_fallthru
          _
        // Predicated region
        $region41: #{tpu_custom_call.1} parent=11 // pred_check
          %p500 = pneg %p253
        $region42: #{tpu_custom_call.1} parent=11 // pred_check_branch
          %502 = sbr.rel (%p500) target = $region44
        $region43: #{tpu_custom_call.1} parent=11 // pred_region
          %s504 = ssub.s32 512, 512
          %505 = vsyncadd [#allocation16], %s504
          %s506 = sshll.u32 [#allocation15], 4
          %s507 = int_to_ptr.vmem [resolvable:$true] %s506
          %512 = dma.hbm_to_vmem [thread:$0]  %s9, 512, %s507, [#allocation16], 64, 64, 4
        $region44: #{tpu_custom_call.1} parent=11 // pred_fallthru
          _
        // Predicated region
        $region45: #{tpu_custom_call.1} parent=11 // pred_check
          %p513 = pneg %p274
        $region46: #{tpu_custom_call.1} parent=11 // pred_check_branch
          %515 = sbr.rel (%p513) target = $region48
        $region47: #{tpu_custom_call.1} parent=11 // pred_region
          %s517 = ssub.s32 32, 32
          %518 = vsyncadd [#allocation16], %s517
          %s519 = sshll.u32 [#allocation17], 4
          %s520 = int_to_ptr.vmem [resolvable:$true] %s519
          %525 = dma.hbm_to_vmem [thread:$0]  %s10, 32, %s520, [#allocation16], 16, 16, 1
        $region48: #{tpu_custom_call.1} parent=11 // pred_fallthru
          _
        // Predicated region
        $region49: #{tpu_custom_call.1} parent=11 // pred_check
          %p526 = pneg %p295
        $region50: #{tpu_custom_call.1} parent=11 // pred_check_branch
          %528 = sbr.rel (%p526) target = $region52
        $region51: #{tpu_custom_call.1} parent=11 // pred_region
          _
        $region52: #{tpu_custom_call.1} parent=11 // pred_fallthru
          _
        // Predicated region
        $region53: #{tpu_custom_call.1} parent=11 // pred_check
          %p529 = pneg %p316
        $region54: #{tpu_custom_call.1} parent=11 // pred_check_branch
          %531 = sbr.rel (%p529) target = $region56
        $region55: #{tpu_custom_call.1} parent=11 // pred_region
          _
        $region56: #{tpu_custom_call.1} parent=11 // pred_fallthru
          _
        // Predicated region
        $region57: #{tpu_custom_call.1} parent=11 // pred_check
          %p532 = pneg %p337
        $region58: #{tpu_custom_call.1} parent=11 // pred_check_branch
          %534 = sbr.rel (%p532) target = $region60
        $region59: #{tpu_custom_call.1} parent=11 // pred_region
          _
        $region60: #{tpu_custom_call.1} parent=11 // pred_fallthru
          _
        // Predicated region
        $region61: #{tpu_custom_call.1} parent=11 // pred_check
          %p535 = pneg %p358
        $region62: #{tpu_custom_call.1} parent=11 // pred_check_branch
          %537 = sbr.rel (%p535) target = $region64
        $region63: #{tpu_custom_call.1} parent=11 // pred_region
          _
        $region64: #{tpu_custom_call.1} parent=11 // pred_fallthru
          _
      $region12: #{tpu_custom_call.1} parent=5 // pred_fallthru
        _
      %p538 = scmp.lt.s32.totalorder %s33, 2
      // Predicated region
      $region65: #{tpu_custom_call.1} parent=5 // pred_check
        %p539 = pneg %p538
      $region66: #{tpu_custom_call.1} parent=5 // pred_check_branch
        %541 = sbr.rel (%p539) target = $region68
      $region67: #{tpu_custom_call.1} parent=5 // pred_region
        // Predicated region
        $region69: #{tpu_custom_call.1} parent=67 // pred_check
          %p542 = pneg %p53
        $region70: #{tpu_custom_call.1} parent=67 // pred_check_branch
          %544 = sbr.rel (%p542) target = $region72
        $region71: #{tpu_custom_call.1} parent=67 // pred_region
          %s545 = sand.u32 %s43, 1
          %s546 = scalar_lea.sflag [#allocation4], %s545
          %s547 = sand.u32 %s43, 1
          %s548 = smul.addr %s547, 8
          %s549 = scalar_lea.vmem [#allocation3], %s548
          %s551 = ssub.s32 128, 128
          %552 = vsyncadd %s546, %s551
          %s553 = smul.addr %s33, 128
          %s554 = scalar_lea.hbm %s0, %s553
          %s556 = sshll.u32 %s549, 4
          %s557 = int_to_ptr.vmem [resolvable:$true] %s556
          %559 = dma.hbm_to_vmem [thread:$0]  %s554, 128, %s557, %s546
        $region72: #{tpu_custom_call.1} parent=67 // pred_fallthru
          _
        // Predicated region
        $region73: #{tpu_custom_call.1} parent=67 // pred_check
          %p560 = pneg %p79
        $region74: #{tpu_custom_call.1} parent=67 // pred_check_branch
          %562 = sbr.rel (%p560) target = $region76
        $region75: #{tpu_custom_call.1} parent=67 // pred_region
          %p563 = scmp.lt.s32.totalorder %s33, 1
          %s564 = scalar_select %p563, %s33, 1
          %s565 = smul.addr %s564, 8
          %s566 = scalar_lea.vmem %s1, %s565
        $region76: #{tpu_custom_call.1} parent=67 // pred_fallthru
          _
      $region68: #{tpu_custom_call.1} parent=5 // pred_fallthru
        _
      %p567 = scmp.le.s32.totalorder 1, %s33
      %p568 = scmp.lt.s32.totalorder %s33, 3
      %p569 = pnand %p567, %p568
      %p570 = pneg %p569
      // Predicated region
      $region77: #{tpu_custom_call.1} parent=5 // pred_check
        _
      $region78: #{tpu_custom_call.1} parent=5 // pred_check_branch
        %572 = sbr.rel (%p569) target = $region80
      $region79: #{tpu_custom_call.1} parent=5 // pred_region
        %s573 = ssub.s32 %s33, 1
        %s574 = sand.u32 %s46, 1
        %s575 = scalar_lea.sflag [#allocation4], %s574
        %s576 = sand.u32 %s46, 1
        %s577 = smul.addr %s576, 8
        %s578 = scalar_lea.vmem [#allocation3], %s577
        // Predicated region
        $region81: #{tpu_custom_call.1} parent=79 // pred_check
          %p579 = pneg %p59
        $region82: #{tpu_custom_call.1} parent=79 // pred_check_branch
          %581 = sbr.rel (%p579) target = $region84
        $region83: #{tpu_custom_call.1} parent=79 // pred_region
          %582 = dma.done %s575, 128
        $region84: #{tpu_custom_call.1} parent=79 // pred_fallthru
          _
        // Predicated region
        $region85: #{tpu_custom_call.1} parent=79 // pred_check
          %p583 = pneg %p106
        $region86: #{tpu_custom_call.1} parent=79 // pred_check_branch
          %585 = sbr.rel (%p583) target = $region88
        $region87: #{tpu_custom_call.1} parent=79 // pred_region
          %586 = dma.done [#allocation7], 16
        $region88: #{tpu_custom_call.1} parent=79 // pred_fallthru
          _
        // Predicated region
        $region89: #{tpu_custom_call.1} parent=79 // pred_check
          %p587 = pneg %p127
        $region90: #{tpu_custom_call.1} parent=79 // pred_check_branch
          %589 = sbr.rel (%p587) target = $region92
        $region91: #{tpu_custom_call.1} parent=79 // pred_region
          %590 = dma.done [#allocation7], 16
        $region92: #{tpu_custom_call.1} parent=79 // pred_fallthru
          _
        // Predicated region
        $region93: #{tpu_custom_call.1} parent=79 // pred_check
          %p591 = pneg %p169
        $region94: #{tpu_custom_call.1} parent=79 // pred_check_branch
          %593 = sbr.rel (%p591) target = $region96
        $region95: #{tpu_custom_call.1} parent=79 // pred_region
          %594 = dma.done [#allocation10], 16
        $region96: #{tpu_custom_call.1} parent=79 // pred_fallthru
          _
        // Predicated region
        $region97: #{tpu_custom_call.1} parent=79 // pred_check
          %p595 = pneg %p190
        $region98: #{tpu_custom_call.1} parent=79 // pred_check_branch
          %597 = sbr.rel (%p595) target = $region100
        $region99: #{tpu_custom_call.1} parent=79 // pred_region
          %598 = dma.done [#allocation10], 1536
        $region100: #{tpu_custom_call.1} parent=79 // pred_fallthru
          _
        // Predicated region
        $region101: #{tpu_custom_call.1} parent=79 // pred_check
          %p599 = pneg %p211
        $region102: #{tpu_custom_call.1} parent=79 // pred_check_branch
          %601 = sbr.rel (%p599) target = $region104
        $region103: #{tpu_custom_call.1} parent=79 // pred_region
          %602 = dma.done [#allocation13], 64
        $region104: #{tpu_custom_call.1} parent=79 // pred_fallthru
          _
        // Predicated region
        $region105: #{tpu_custom_call.1} parent=79 // pred_check
          %p603 = pneg %p232
        $region106: #{tpu_custom_call.1} parent=79 // pred_check_branch
          %605 = sbr.rel (%p603) target = $region108
        $region107: #{tpu_custom_call.1} parent=79 // pred_region
          %606 = dma.done [#allocation13], 32
        $region108: #{tpu_custom_call.1} parent=79 // pred_fallthru
          _
        // Predicated region
        $region109: #{tpu_custom_call.1} parent=79 // pred_check
          %p607 = pneg %p253
        $region110: #{tpu_custom_call.1} parent=79 // pred_check_branch
          %609 = sbr.rel (%p607) target = $region112
        $region111: #{tpu_custom_call.1} parent=79 // pred_region
          %610 = dma.done [#allocation16], 512
        $region112: #{tpu_custom_call.1} parent=79 // pred_fallthru
          _
        // Predicated region
        $region113: #{tpu_custom_call.1} parent=79 // pred_check
          %p611 = pneg %p274
        $region114: #{tpu_custom_call.1} parent=79 // pred_check_branch
          %613 = sbr.rel (%p611) target = $region116
        $region115: #{tpu_custom_call.1} parent=79 // pred_region
          %614 = dma.done [#allocation16], 32
        $region116: #{tpu_custom_call.1} parent=79 // pred_fallthru
          _
        %s615 = sand.u32 %s46, 1
        %s616 = scalar_lea.sflag [#allocation4], %s615
        %s617 = sand.u32 %s46, 1
        %s618 = smul.addr %s617, 8
        %s619 = scalar_lea.vmem [#allocation3], %s618
        %p620 = pneg %p59
        %p621 = pneg %p56
        %p622 = scmp.lt.s32.totalorder %s38, 1
        %s623 = scalar_select %p622, %s38, 1
        %s624 = smul.addr %s623, 8
        %s625 = scalar_lea.vmem %s1, %s624
        %p626 = pneg %p85
        %p627 = pneg %p82
        %p628 = pneg %p106
        %p629 = pneg %p103
        %p630 = pneg %p127
        %p631 = pneg %p124
        %p632 = pneg %p148
        %p633 = pneg %p145
        %p634 = pneg %p169
        %p635 = pneg %p166
        %p636 = pneg %p190
        %p637 = pneg %p187
        %p638 = pneg %p211
        %p639 = pneg %p208
        %p640 = pneg %p232
        %p641 = pneg %p229
        %p642 = pneg %p253
        %p643 = pneg %p250
        %p644 = pneg %p274
        %p645 = pneg %p271
        %p646 = pneg %p295
        %p647 = pneg %p292
        %p648 = pneg %p316
        %p649 = pneg %p313
        %p650 = pneg %p337
        %p651 = pneg %p334
        %p652 = pneg %p358
        %p653 = pneg %p355
        %p654 = pneg %p384
        %p655 = pneg %p381
        %s656 = sand.u32 %s371, 1
        %s657 = scalar_lea.sflag [#allocation5], %s656
        %s658 = sand.u32 %s371, 1
        %s659 = smul.addr %s658, 8
        %s660 = scalar_lea.vmem [#allocation18], %s659
        %p661 = pneg %p410
        %p662 = pneg %p407
        %p663 = scmp.lt.s32.totalorder %s38, 1
        %s664 = scalar_select %p663, %s38, 1
        %s665 = scalar_lea.vmem %s16, %s664
        %p666 = scmp.lt.s32.totalorder %s38, 1
        %s667 = scalar_select %p666, %s38, 1
        %s668 = smul.addr %s667, 8
        %s669 = scalar_lea.vmem %s1, %s668
        %p670 = scmp.lt.s32.totalorder %s38, 1
        %s671 = scalar_select %p670, %s38, 1
        %s672 = scalar_lea.vmem %s16, %s671
        %v674 = vld [vmem:[#allocation6] sm:$0x1]
        %v675 = vld [vmem:[#allocation8] sm:$0x1]
        %v676 = vld [vmem:[%s578] sm:$0xff]
        %v678 = vlaneseq
        %v679 = vshrl.u32 %v678, 7
        %v680 = vsub.s32 0, %v679
        %v681 = vrot.slane %v674, %v680
        %v683 = vadd.f32 %v676, %v681
        %v685 = vlaneseq
        %v686 = vshrl.u32 %v685, 7
        %v687 = vsub.s32 0, %v686
        %v688 = vrot.slane %v675, %v687
        %v690 = vmul.f32 %v688, %v683
        %v691 = vld [vmem:[%s669] sm:$0xff]
        %v692 = vpack.c.bf16 %v691, %v691
        %vm693 = vcmask 257024
        %694 = vst.msk [vmem:[#allocation2] sm:$0xf] %vm693, 0
        %695 = vst.msk [vmem:[#allocation2 + $0x8] sm:$0xf] %vm693, 0
        %vm696 = vcmask 31744
        %v697 = vsel %vm696, %v690, 0.0
        %v698 = vpack.c.bf16 %v697, %v697
        %699 = vst.msk [vmem:[#allocation2 + $0x4] sm:$0xf] %vm693, %v698
        %v700 = vld [vmem:[#allocation2] sm:$0x8]
        %v701 = vld [vmem:[#allocation2 + $0x4] sm:$0xf]
        %v702 = vld [vmem:[%s4] sm:$0xf]
        %v703 = vld [vmem:[%s4 + $0x4] sm:$0xf]
        %v704 = vld [vmem:[%s4 + $0x8] sm:$0xf]
        %v705 = vld [vmem:[%s4 + $0xc] sm:$0xf]
        %s706 = scalar_lea.vmem %s4, 16
        %v707 = vld [vmem:[%s706] sm:$0xf]
        %v708 = vld [vmem:[%s706 + $0x4] sm:$0xf]
        %v709 = vld [vmem:[%s706 + $0x8] sm:$0xf]
        %v710 = vld [vmem:[%s706 + $0xc] sm:$0xf]
        %v715 = vunpack.c.l.b16 %v707
        %v716 = vunpack.c.l.b16 %v708
        %v717 = vunpack.c.l.b16 %v709
        %v718 = vunpack.c.l.b16 %v710
        %v719 = vpack.c.b16 %v716, %v715
        %v720 = vpack.c.b16 %v718, %v717
        %vm723 = vcmask 261120
        %v725 = vsel %vm723, %v701, 0
        %727 = vmatprep.subr.bf16.mxu0 0
        %728 = vmatpush1.bf16.msra.mxu0 0
        %729 = vmatprep.subr.bf16.mxu0 0
        %730 = vmatpush1.bf16.msra.mxu0 0
        %731 = vmatprep.subr.bf16.mxu0 0
        %732 = vmatpush1.bf16.msra.mxu0 0
        %733 = vmatprep.subr.bf16.mxu0 0
        %734 = vmatpush1.bf16.msra.mxu0 0
        %735 = vmatprep.subr.bf16.mxu0 0
        %736 = vmatpush1.bf16.msra.mxu0 0
        %737 = vmatprep.subr.bf16.mxu0 0
        %738 = vmatpush1.bf16.msra.mxu0 0
        %739 = vmatprep.subr.bf16.mxu0 0
        %740 = vmatpush1.bf16.msra.mxu0 %v720
        %741 = vmatprep.subr.bf16.mxu0 0
        %742 = vmatpush1.bf16.msra.mxu0 %v719
        %743 = vmatprep.subr.bf16.mxu0 0
        %744 = vmatpush2.bf16.msra.mxu0 0
        %745 = vmatprep.subr.bf16.mxu0 0
        %746 = vmatpush2.bf16.msra.mxu0 0
        %747 = vmatprep.subr.bf16.mxu0 0
        %748 = vmatpush2.bf16.msra.mxu0 0
        %749 = vmatprep.subr.bf16.mxu0 0
        %750 = vmatpush2.bf16.msra.mxu0 0
        %751 = vmatprep.subr.bf16.mxu0 0
        %752 = vmatpush2.bf16.msra.mxu0 0
        %753 = vmatprep.subr.bf16.mxu0 0
        %754 = vmatpush2.bf16.msra.mxu0 0
        %755 = vmatprep.subr.bf16.mxu0 0
        %756 = vmatpush2.bf16.msra.mxu0 0
        %757 = vmatprep.subr.bf16.mxu0 0
        %758 = vmatpush2.bf16.msra.mxu0 0
        %759 = vmatprep.mubr.bf16.mxu0 0
        %760 = vmatmul.mubr.bf16.gmra.mxu0 %v725
        %v761 = vpop.f32.mrf.mxu0
        %v762 = vadd.f32 0.0, %v761
        %v763 = vpop.f32.mrf.mxu0
        %v764 = vpop.f32.mrf.mxu0
        %v765 = vpop.f32.mrf.mxu0
        %766 = vdwg.mxu0
        %v769 = vunpack.c.l.b16 %v700
        %v770 = vunpack.c.l.b16 %v701
        %v771 = vpack.c.b16 %v770, %v769
        %v773 = vshrl.u32 %v771, 16
        %v775 = vrot.slane %v773, 3
        %v776 = vshll.u32 %v771, 16
        %v778 = vrot.slane %v776, 4
        %v779 = vor.u32 %v775, %v778
        %v784 = vunpack.c.l.b16 %v702
        %v785 = vunpack.c.l.b16 %v703
        %v786 = vunpack.c.l.b16 %v704
        %v787 = vunpack.c.l.b16 %v705
        %v788 = vpack.c.b16 %v785, %v784
        %v789 = vpack.c.b16 %v787, %v786
        %v793 = vsel %vm723, %v779, 0
        %795 = vmatprep.subr.bf16.mxu0 0
        %796 = vmatpush1.bf16.msra.mxu0 0
        %797 = vmatprep.subr.bf16.mxu0 0
        %798 = vmatpush1.bf16.msra.mxu0 0
        %799 = vmatprep.subr.bf16.mxu0 0
        %800 = vmatpush1.bf16.msra.mxu0 0
        %801 = vmatprep.subr.bf16.mxu0 0
        %802 = vmatpush1.bf16.msra.mxu0 0
        %803 = vmatprep.subr.bf16.mxu0 0
        %804 = vmatpush1.bf16.msra.mxu0 0
        %805 = vmatprep.subr.bf16.mxu0 0
        %806 = vmatpush1.bf16.msra.mxu0 0
        %807 = vmatprep.subr.bf16.mxu0 0
        %808 = vmatpush1.bf16.msra.mxu0 %v789
        %809 = vmatprep.subr.bf16.mxu0 0
        %810 = vmatpush1.bf16.msra.mxu0 %v788
        %811 = vmatprep.subr.bf16.mxu0 0
        %812 = vmatpush2.bf16.msra.mxu0 0
        %813 = vmatprep.subr.bf16.mxu0 0
        %814 = vmatpush2.bf16.msra.mxu0 0
        %815 = vmatprep.subr.bf16.mxu0 0
        %816 = vmatpush2.bf16.msra.mxu0 0
        %817 = vmatprep.subr.bf16.mxu0 0
        %818 = vmatpush2.bf16.msra.mxu0 0
        %819 = vmatprep.subr.bf16.mxu0 0
        %820 = vmatpush2.bf16.msra.mxu0 0
        %821 = vmatprep.subr.bf16.mxu0 0
        %822 = vmatpush2.bf16.msra.mxu0 0
        %823 = vmatprep.subr.bf16.mxu0 0
        %824 = vmatpush2.bf16.msra.mxu0 0
        %825 = vmatprep.subr.bf16.mxu0 0
        %826 = vmatpush2.bf16.msra.mxu0 0
        %827 = vmatprep.mubr.bf16.mxu0 0
        %828 = vmatmul.mubr.bf16.gmra.mxu0 %v793
        %v829 = vpop.f32.mrf.mxu0
        %v830 = vadd.f32 %v762, %v829
        %v831 = vpop.f32.mrf.mxu0
        %v832 = vpop.f32.mrf.mxu0
        %v833 = vpop.f32.mrf.mxu0
        %834 = vdwg.mxu0
        %v835 = vld [vmem:[#allocation2 + $0x4] sm:$0xf]
        %v836 = vld [vmem:[#allocation2 + $0x8] sm:$0x1]
        %s837 = scalar_lea.vmem %s4, 32
        %v838 = vld [vmem:[%s837] sm:$0xf]
        %v839 = vld [vmem:[%s837 + $0x4] sm:$0xf]
        %v840 = vld [vmem:[%s837 + $0x8] sm:$0xf]
        %v841 = vld [vmem:[%s837 + $0xc] sm:$0xf]
        %v844 = vunpack.c.l.b16 %v835
        %v845 = vunpack.c.l.b16 %v836
        %v846 = vpack.c.b16 %v845, %v844
        %v848 = vshrl.u32 %v846, 16
        %v850 = vshll.u32 %v846, 16
        %v852 = vrot.slane %v850, 1
        %v853 = vor.u32 %v848, %v852
        %v858 = vunpack.c.l.b16 %v838
        %v859 = vunpack.c.l.b16 %v839
        %v860 = vunpack.c.l.b16 %v840
        %v861 = vunpack.c.l.b16 %v841
        %v862 = vpack.c.b16 %v859, %v858
        %v863 = vpack.c.b16 %v861, %v860
        %v867 = vsel %vm723, %v853, 0
        %869 = vmatprep.subr.bf16.mxu0 0
        %870 = vmatpush1.bf16.msra.mxu0 0
        %871 = vmatprep.subr.bf16.mxu0 0
        %872 = vmatpush1.bf16.msra.mxu0 0
        %873 = vmatprep.subr.bf16.mxu0 0
        %874 = vmatpush1.bf16.msra.mxu0 0
        %875 = vmatprep.subr.bf16.mxu0 0
        %876 = vmatpush1.bf16.msra.mxu0 0
        %877 = vmatprep.subr.bf16.mxu0 0
        %878 = vmatpush1.bf16.msra.mxu0 0
        %879 = vmatprep.subr.bf16.mxu0 0
        %880 = vmatpush1.bf16.msra.mxu0 0
        %881 = vmatprep.subr.bf16.mxu0 0
        %882 = vmatpush1.bf16.msra.mxu0 %v863
        %883 = vmatprep.subr.bf16.mxu0 0
        %884 = vmatpush1.bf16.msra.mxu0 %v862
        %885 = vmatprep.subr.bf16.mxu0 0
        %886 = vmatpush2.bf16.msra.mxu0 0
        %887 = vmatprep.subr.bf16.mxu0 0
        %888 = vmatpush2.bf16.msra.mxu0 0
        %889 = vmatprep.subr.bf16.mxu0 0
        %890 = vmatpush2.bf16.msra.mxu0 0
        %891 = vmatprep.subr.bf16.mxu0 0
        %892 = vmatpush2.bf16.msra.mxu0 0
        %893 = vmatprep.subr.bf16.mxu0 0
        %894 = vmatpush2.bf16.msra.mxu0 0
        %895 = vmatprep.subr.bf16.mxu0 0
        %896 = vmatpush2.bf16.msra.mxu0 0
        %897 = vmatprep.subr.bf16.mxu0 0
        %898 = vmatpush2.bf16.msra.mxu0 0
        %899 = vmatprep.subr.bf16.mxu0 0
        %900 = vmatpush2.bf16.msra.mxu0 0
        %901 = vmatprep.mubr.bf16.mxu0 0
        %902 = vmatmul.mubr.bf16.gmra.mxu0 %v867
        %v903 = vpop.f32.mrf.mxu0
        %v904 = vadd.f32 0.0, %v903
        %v905 = vpop.f32.mrf.mxu0
        %v906 = vpop.f32.mrf.mxu0
        %v907 = vpop.f32.mrf.mxu0
        %908 = vdwg.mxu0
        %v909 = vadd.f32 %v830, %v904
        %v910 = vld [vmem:[#allocation9] sm:$0x1]
        %v912 = vlaneseq
        %v913 = vshrl.u32 %v912, 7
        %v914 = vsub.s32 0, %v913
        %v915 = vrot.slane %v910, %v914
        %v917 = vadd.f32 %v909, %v915
        %v918 = vpack.c.bf16 %v917, %v917
        %919 = vst.msk [vmem:[#allocation2 + $0x4] sm:$0xf] %vm693, %v918
        %v920 = vld [vmem:[#allocation12] sm:$0x3]
        %v921 = vld [vmem:[#allocation14] sm:$0x1]
        %v923 = vlaneseq
        %v924 = vshrl.u32 %v923, 7
        %v925 = vsub.s32 0, %v924
        %v926 = vrot.slane %v921, %v925
        %v929 = vsel %vm696, %v692, 0
        %vm931 = vcmask 1041408
        %v933 = vsel %vm931, %v920, 0
        %935 = vmatprep.subr.bf16.mxu0 0
        %936 = vmatpush1.bf16.msra.mxu0 0
        %937 = vmatprep.subr.bf16.mxu0 0
        %938 = vmatpush1.bf16.msra.mxu0 0
        %939 = vmatprep.subr.bf16.mxu0 0
        %940 = vmatpush1.bf16.msra.mxu0 0
        %941 = vmatprep.subr.bf16.mxu0 0
        %942 = vmatpush1.bf16.msra.mxu0 0
        %943 = vmatprep.subr.bf16.mxu0 0
        %944 = vmatpush1.bf16.msra.mxu0 0
        %945 = vmatprep.subr.bf16.mxu0 0
        %946 = vmatpush1.bf16.msra.mxu0 0
        %947 = vmatprep.subr.bf16.mxu0 0
        %948 = vmatpush1.bf16.msra.mxu0 0
        %949 = vmatprep.subr.bf16.mxu0 0
        %950 = vmatpush1.bf16.msra.mxu0 %v933
        %951 = vmatprep.subr.bf16.mxu0 0
        %952 = vmatpush2.bf16.msra.mxu0 0
        %953 = vmatprep.subr.bf16.mxu0 0
        %954 = vmatpush2.bf16.msra.mxu0 0
        %955 = vmatprep.subr.bf16.mxu0 0
        %956 = vmatpush2.bf16.msra.mxu0 0
        %957 = vmatprep.subr.bf16.mxu0 0
        %958 = vmatpush2.bf16.msra.mxu0 0
        %959 = vmatprep.subr.bf16.mxu0 0
        %960 = vmatpush2.bf16.msra.mxu0 0
        %961 = vmatprep.subr.bf16.mxu0 0
        %962 = vmatpush2.bf16.msra.mxu0 0
        %963 = vmatprep.subr.bf16.mxu0 0
        %964 = vmatpush2.bf16.msra.mxu0 0
        %965 = vmatprep.subr.bf16.mxu0 0
        %966 = vmatpush2.bf16.msra.mxu0 0
        %967 = vmatprep.mubr.bf16.mxu0 0
        %968 = vmatmul.mubr.bf16.gmra.mxu0 %v929
        %v969 = vpop.f32.mrf.mxu0
        %v970 = vadd.f32 %v926, %v969
        %v971 = vpop.f32.mrf.mxu0
        %v972 = vpop.f32.mrf.mxu0
        %v973 = vpop.f32.mrf.mxu0
        %974 = vdwg.mxu0
        %v975 = vld [vmem:[#allocation2] sm:$0x8]
        %v976 = vld [vmem:[#allocation2 + $0x4] sm:$0xf]
        %v977 = vld [vmem:[#allocation11] sm:$0xf]
        %v978 = vld [vmem:[#allocation11 + $0x4] sm:$0xf]
        %v979 = vld [vmem:[#allocation11 + $0x8] sm:$0xf]
        %v980 = vld [vmem:[#allocation11 + $0xc] sm:$0xf]
        %v983 = vunpack.c.l.b16 %v975
        %v984 = vunpack.c.l.b16 %v976
        %v985 = vpack.c.b16 %v984, %v983
        %v987 = vshrl.u32 %v985, 16
        %v989 = vrot.slane %v987, 3
        %v990 = vshll.u32 %v985, 16
        %v992 = vrot.slane %v990, 4
        %v993 = vor.u32 %v989, %v992
        %v998 = vunpack.c.l.b16 %v977
        %v999 = vunpack.c.l.b16 %v978
        %v1000 = vunpack.c.l.b16 %v979
        %v1001 = vunpack.c.l.b16 %v980
        %v1002 = vpack.c.b16 %v999, %v998
        %v1003 = vpack.c.b16 %v1001, %v1000
        %v1007 = vsel %vm723, %v993, 0
        %1009 = vmatprep.subr.bf16.mxu0 0
        %1010 = vmatpush1.bf16.msra.mxu0 0
        %1011 = vmatprep.subr.bf16.mxu0 0
        %1012 = vmatpush1.bf16.msra.mxu0 0
        %1013 = vmatprep.subr.bf16.mxu0 0
        %1014 = vmatpush1.bf16.msra.mxu0 0
        %1015 = vmatprep.subr.bf16.mxu0 0
        %1016 = vmatpush1.bf16.msra.mxu0 0
        %1017 = vmatprep.subr.bf16.mxu0 0
        %1018 = vmatpush1.bf16.msra.mxu0 0
        %1019 = vmatprep.subr.bf16.mxu0 0
        %1020 = vmatpush1.bf16.msra.mxu0 0
        %1021 = vmatprep.subr.bf16.mxu0 0
        %1022 = vmatpush1.bf16.msra.mxu0 %v1003
        %1023 = vmatprep.subr.bf16.mxu0 0
        %1024 = vmatpush1.bf16.msra.mxu0 %v1002
        %1025 = vmatprep.subr.bf16.mxu0 0
        %1026 = vmatpush2.bf16.msra.mxu0 0
        %1027 = vmatprep.subr.bf16.mxu0 0
        %1028 = vmatpush2.bf16.msra.mxu0 0
        %1029 = vmatprep.subr.bf16.mxu0 0
        %1030 = vmatpush2.bf16.msra.mxu0 0
        %1031 = vmatprep.subr.bf16.mxu0 0
        %1032 = vmatpush2.bf16.msra.mxu0 0
        %1033 = vmatprep.subr.bf16.mxu0 0
        %1034 = vmatpush2.bf16.msra.mxu0 0
        %1035 = vmatprep.subr.bf16.mxu0 0
        %1036 = vmatpush2.bf16.msra.mxu0 0
        %1037 = vmatprep.subr.bf16.mxu0 0
        %1038 = vmatpush2.bf16.msra.mxu0 0
        %1039 = vmatprep.subr.bf16.mxu0 0
        %1040 = vmatpush2.bf16.msra.mxu0 0
        %1041 = vmatprep.mubr.bf16.mxu0 0
        %1042 = vmatmul.mubr.bf16.gmra.mxu0 %v1007
        %v1043 = vpop.f32.mrf.mxu0
        %v1044 = vadd.f32 0.0, %v1043
        %v1045 = vpop.f32.mrf.mxu0
        %v1046 = vpop.f32.mrf.mxu0
        %v1047 = vpop.f32.mrf.mxu0
        %1048 = vdwg.mxu0
        %v1049 = vadd.f32 %v970, %v1044
        %s1050 = scalar_lea.vmem [#allocation11], 16
        %v1051 = vld [vmem:[%s1050] sm:$0xf]
        %v1052 = vld [vmem:[%s1050 + $0x4] sm:$0xf]
        %v1053 = vld [vmem:[%s1050 + $0x8] sm:$0xf]
        %v1054 = vld [vmem:[%s1050 + $0xc] sm:$0xf]
        %v1059 = vunpack.c.l.b16 %v1051
        %v1060 = vunpack.c.l.b16 %v1052
        %v1061 = vunpack.c.l.b16 %v1053
        %v1062 = vunpack.c.l.b16 %v1054
        %v1063 = vpack.c.b16 %v1060, %v1059
        %v1064 = vpack.c.b16 %v1062, %v1061
        %v1068 = vsel %vm723, %v976, 0
        %1070 = vmatprep.subr.bf16.mxu0 0
        %1071 = vmatpush1.bf16.msra.mxu0 0
        %1072 = vmatprep.subr.bf16.mxu0 0
        %1073 = vmatpush1.bf16.msra.mxu0 0
        %1074 = vmatprep.subr.bf16.mxu0 0
        %1075 = vmatpush1.bf16.msra.mxu0 0
        %1076 = vmatprep.subr.bf16.mxu0 0
        %1077 = vmatpush1.bf16.msra.mxu0 0
        %1078 = vmatprep.subr.bf16.mxu0 0
        %1079 = vmatpush1.bf16.msra.mxu0 0
        %1080 = vmatprep.subr.bf16.mxu0 0
        %1081 = vmatpush1.bf16.msra.mxu0 0
        %1082 = vmatprep.subr.bf16.mxu0 0
        %1083 = vmatpush1.bf16.msra.mxu0 %v1064
        %1084 = vmatprep.subr.bf16.mxu0 0
        %1085 = vmatpush1.bf16.msra.mxu0 %v1063
        %1086 = vmatprep.subr.bf16.mxu0 0
        %1087 = vmatpush2.bf16.msra.mxu0 0
        %1088 = vmatprep.subr.bf16.mxu0 0
        %1089 = vmatpush2.bf16.msra.mxu0 0
        %1090 = vmatprep.subr.bf16.mxu0 0
        %1091 = vmatpush2.bf16.msra.mxu0 0
        %1092 = vmatprep.subr.bf16.mxu0 0
        %1093 = vmatpush2.bf16.msra.mxu0 0
        %1094 = vmatprep.subr.bf16.mxu0 0
        %1095 = vmatpush2.bf16.msra.mxu0 0
        %1096 = vmatprep.subr.bf16.mxu0 0
        %1097 = vmatpush2.bf16.msra.mxu0 0
        %1098 = vmatprep.subr.bf16.mxu0 0
        %1099 = vmatpush2.bf16.msra.mxu0 0
        %1100 = vmatprep.subr.bf16.mxu0 0
        %1101 = vmatpush2.bf16.msra.mxu0 0
        %1102 = vmatprep.mubr.bf16.mxu0 0
        %1103 = vmatmul.mubr.bf16.gmra.mxu0 %v1068
        %v1104 = vpop.f32.mrf.mxu0
        %v1105 = vadd.f32 0.0, %v1104
        %v1106 = vpop.f32.mrf.mxu0
        %v1107 = vpop.f32.mrf.mxu0
        %v1108 = vpop.f32.mrf.mxu0
        %1109 = vdwg.mxu0
        %v1110 = vadd.f32 %v1049, %v1105
        %v1111 = vld [vmem:[#allocation2 + $0x4] sm:$0xf]
        %v1112 = vld [vmem:[#allocation2 + $0x8] sm:$0x1]
        %s1113 = scalar_lea.vmem [#allocation11], 32
        %v1114 = vld [vmem:[%s1113] sm:$0xf]
        %v1115 = vld [vmem:[%s1113 + $0x4] sm:$0xf]
        %v1116 = vld [vmem:[%s1113 + $0x8] sm:$0xf]
        %v1117 = vld [vmem:[%s1113 + $0xc] sm:$0xf]
        %v1120 = vunpack.c.l.b16 %v1111
        %v1121 = vunpack.c.l.b16 %v1112
        %v1122 = vpack.c.b16 %v1121, %v1120
        %v1124 = vshrl.u32 %v1122, 16
        %v1126 = vshll.u32 %v1122, 16
        %v1128 = vrot.slane %v1126, 1
        %v1129 = vor.u32 %v1124, %v1128
        %v1134 = vunpack.c.l.b16 %v1114
        %v1135 = vunpack.c.l.b16 %v1115
        %v1136 = vunpack.c.l.b16 %v1116
        %v1137 = vunpack.c.l.b16 %v1117
        %v1138 = vpack.c.b16 %v1135, %v1134
        %v1139 = vpack.c.b16 %v1137, %v1136
        %v1143 = vsel %vm723, %v1129, 0
        %1145 = vmatprep.subr.bf16.mxu0 0
        %1146 = vmatpush1.bf16.msra.mxu0 0
        %1147 = vmatprep.subr.bf16.mxu0 0
        %1148 = vmatpush1.bf16.msra.mxu0 0
        %1149 = vmatprep.subr.bf16.mxu0 0
        %1150 = vmatpush1.bf16.msra.mxu0 0
        %1151 = vmatprep.subr.bf16.mxu0 0
        %1152 = vmatpush1.bf16.msra.mxu0 0
        %1153 = vmatprep.subr.bf16.mxu0 0
        %1154 = vmatpush1.bf16.msra.mxu0 0
        %1155 = vmatprep.subr.bf16.mxu0 0
        %1156 = vmatpush1.bf16.msra.mxu0 0
        %1157 = vmatprep.subr.bf16.mxu0 0
        %1158 = vmatpush1.bf16.msra.mxu0 %v1139
        %1159 = vmatprep.subr.bf16.mxu0 0
        %1160 = vmatpush1.bf16.msra.mxu0 %v1138
        %1161 = vmatprep.subr.bf16.mxu0 0
        %1162 = vmatpush2.bf16.msra.mxu0 0
        %1163 = vmatprep.subr.bf16.mxu0 0
        %1164 = vmatpush2.bf16.msra.mxu0 0
        %1165 = vmatprep.subr.bf16.mxu0 0
        %1166 = vmatpush2.bf16.msra.mxu0 0
        %1167 = vmatprep.subr.bf16.mxu0 0
        %1168 = vmatpush2.bf16.msra.mxu0 0
        %1169 = vmatprep.subr.bf16.mxu0 0
        %1170 = vmatpush2.bf16.msra.mxu0 0
        %1171 = vmatprep.subr.bf16.mxu0 0
        %1172 = vmatpush2.bf16.msra.mxu0 0
        %1173 = vmatprep.subr.bf16.mxu0 0
        %1174 = vmatpush2.bf16.msra.mxu0 0
        %1175 = vmatprep.subr.bf16.mxu0 0
        %1176 = vmatpush2.bf16.msra.mxu0 0
        %1177 = vmatprep.mubr.bf16.mxu0 0
        %1178 = vmatmul.mubr.bf16.gmra.mxu0 %v1143
        %v1179 = vpop.f32.mrf.mxu0
        %v1180 = vadd.f32 0.0, %v1179
        %v1181 = vpop.f32.mrf.mxu0
        %v1182 = vpop.f32.mrf.mxu0
        %v1183 = vpop.f32.mrf.mxu0
        %1184 = vdwg.mxu0
        %v1185 = vadd.f32 %v1110, %v1180
        %v1186 = vtanh.pop %v1185
        %v1187 = vxor.u32 %v1185, 2147483648
        %v1188 = vmul.f32 %v1187, 1.442695
        %v1189 = vpow.pop %v1188
        %v1190 = vadd.f32 %v1189, 1.0
        %v1191 = vrcp.pop %v1190
        %v1192 = vmul.f32 1.0, %v1191
        %1194 = vrot.lane.b32.xlu0 %v1192, 96
        %v1195 = vpop.permute.xlu0 %1194
        %v1197 = vmul.f32 %v1186, %v1195
        %v1198 = vpack.c.bf16 %v1197, %v1197
        %v1199 = vld [vmem:[#allocation15] sm:$0xf]
        %v1200 = vld [vmem:[#allocation15 + $0x4] sm:$0xf]
        %v1201 = vld [vmem:[#allocation15 + $0x8] sm:$0xf]
        %v1202 = vld [vmem:[#allocation15 + $0xc] sm:$0xf]
        %v1203 = vld [vmem:[#allocation17] sm:$0x1]
        %v1205 = vlaneseq
        %v1206 = vshrl.u32 %v1205, 7
        %v1207 = vsub.s32 0, %v1206
        %v1208 = vrot.slane %v1203, %v1207
        %v1214 = vunpack.c.l.b16 %v1199
        %v1215 = vunpack.c.l.b16 %v1200
        %v1216 = vunpack.c.l.b16 %v1201
        %v1217 = vunpack.c.l.b16 %v1202
        %v1218 = vpack.c.b16 %v1215, %v1214
        %v1219 = vpack.c.b16 %v1217, %v1216
        %v1223 = vsel %vm723, %v1198, 0
        %1225 = vmatprep.subr.bf16.mxu0 0
        %1226 = vmatpush1.bf16.msra.mxu0 0
        %1227 = vmatprep.subr.bf16.mxu0 0
        %1228 = vmatpush1.bf16.msra.mxu0 0
        %1229 = vmatprep.subr.bf16.mxu0 0
        %1230 = vmatpush1.bf16.msra.mxu0 0
        %1231 = vmatprep.subr.bf16.mxu0 0
        %1232 = vmatpush1.bf16.msra.mxu0 0
        %1233 = vmatprep.subr.bf16.mxu0 0
        %1234 = vmatpush1.bf16.msra.mxu0 0
        %1235 = vmatprep.subr.bf16.mxu0 0
        %1236 = vmatpush1.bf16.msra.mxu0 0
        %1237 = vmatprep.subr.bf16.mxu0 0
        %1238 = vmatpush1.bf16.msra.mxu0 %v1219
        %1239 = vmatprep.subr.bf16.mxu0 0
        %1240 = vmatpush1.bf16.msra.mxu0 %v1218
        %1241 = vmatprep.subr.bf16.mxu0 0
        %1242 = vmatpush2.bf16.msra.mxu0 0
        %1243 = vmatprep.subr.bf16.mxu0 0
        %1244 = vmatpush2.bf16.msra.mxu0 0
        %1245 = vmatprep.subr.bf16.mxu0 0
        %1246 = vmatpush2.bf16.msra.mxu0 0
        %1247 = vmatprep.subr.bf16.mxu0 0
        %1248 = vmatpush2.bf16.msra.mxu0 0
        %1249 = vmatprep.subr.bf16.mxu0 0
        %1250 = vmatpush2.bf16.msra.mxu0 0
        %1251 = vmatprep.subr.bf16.mxu0 0
        %1252 = vmatpush2.bf16.msra.mxu0 0
        %1253 = vmatprep.subr.bf16.mxu0 0
        %1254 = vmatpush2.bf16.msra.mxu0 0
        %1255 = vmatprep.subr.bf16.mxu0 0
        %1256 = vmatpush2.bf16.msra.mxu0 0
        %1257 = vmatprep.mubr.bf16.mxu0 0
        %1258 = vmatmul.mubr.bf16.gmra.mxu0 %v1223
        %v1259 = vpop.f32.mrf.mxu0
        %v1260 = vadd.f32 %v1208, %v1259
        %v1261 = vpop.f32.mrf.mxu0
        %v1262 = vpop.f32.mrf.mxu0
        %v1263 = vpop.f32.mrf.mxu0
        %1264 = vdwg.mxu0
        %v1265 = vadd.f32 %v917, %v1260
        %v1266 = vmul.f32 %v1265, 0.70710677
        %v1267 = vadd.f32 %v1260, 0.0
        %v1268 = vpack.c.bf16 %v1266, %v1266
        %1269 = vst.msk [vmem:[#allocation2 + $0x4] sm:$0xf] %vm693, %v1268
        %s1270 = scalar_lea.vmem [#allocation12], 2
        %v1271 = vld [vmem:[%s1270] sm:$0x3]
        %s1272 = scalar_lea.vmem [#allocation14], 1
        %v1273 = vld [vmem:[%s1272] sm:$0x1]
        %v1275 = vlaneseq
        %v1276 = vshrl.u32 %v1275, 7
        %v1277 = vsub.s32 0, %v1276
        %v1278 = vrot.slane %v1273, %v1277
        %v1281 = vsel %vm931, %v1271, 0
        %1283 = vmatprep.subr.bf16.mxu0 0
        %1284 = vmatpush1.bf16.msra.mxu0 0
        %1285 = vmatprep.subr.bf16.mxu0 0
        %1286 = vmatpush1.bf16.msra.mxu0 0
        %1287 = vmatprep.subr.bf16.mxu0 0
        %1288 = vmatpush1.bf16.msra.mxu0 0
        %1289 = vmatprep.subr.bf16.mxu0 0
        %1290 = vmatpush1.bf16.msra.mxu0 0
        %1291 = vmatprep.subr.bf16.mxu0 0
        %1292 = vmatpush1.bf16.msra.mxu0 0
        %1293 = vmatprep.subr.bf16.mxu0 0
        %1294 = vmatpush1.bf16.msra.mxu0 0
        %1295 = vmatprep.subr.bf16.mxu0 0
        %1296 = vmatpush1.bf16.msra.mxu0 0
        %1297 = vmatprep.subr.bf16.mxu0 0
        %1298 = vmatpush1.bf16.msra.mxu0 %v1281
        %1299 = vmatprep.subr.bf16.mxu0 0
        %1300 = vmatpush2.bf16.msra.mxu0 0
        %1301 = vmatprep.subr.bf16.mxu0 0
        %1302 = vmatpush2.bf16.msra.mxu0 0
        %1303 = vmatprep.subr.bf16.mxu0 0
        %1304 = vmatpush2.bf16.msra.mxu0 0
        %1305 = vmatprep.subr.bf16.mxu0 0
        %1306 = vmatpush2.bf16.msra.mxu0 0
        %1307 = vmatprep.subr.bf16.mxu0 0
        %1308 = vmatpush2.bf16.msra.mxu0 0
        %1309 = vmatprep.subr.bf16.mxu0 0
        %1310 = vmatpush2.bf16.msra.mxu0 0
        %1311 = vmatprep.subr.bf16.mxu0 0
        %1312 = vmatpush2.bf16.msra.mxu0 0
        %1313 = vmatprep.subr.bf16.mxu0 0
        %1314 = vmatpush2.bf16.msra.mxu0 0
        %1315 = vmatprep.mubr.bf16.mxu0 0
        %1316 = vmatmul.mubr.bf16.gmra.mxu0 %v929
        %v1317 = vpop.f32.mrf.mxu0
        %v1318 = vadd.f32 %v1278, %v1317
        %v1319 = vpop.f32.mrf.mxu0
        %v1320 = vpop.f32.mrf.mxu0
        %v1321 = vpop.f32.mrf.mxu0
        %1322 = vdwg.mxu0
        %v1323 = vld [vmem:[#allocation2] sm:$0x8]
        %v1324 = vld [vmem:[#allocation2 + $0x4] sm:$0x7]
        %s1325 = scalar_lea.vmem [#allocation11], 48
        %v1326 = vld [vmem:[%s1325] sm:$0xf]
        %v1327 = vld [vmem:[%s1325 + $0x4] sm:$0xf]
        %v1328 = vld [vmem:[%s1325 + $0x8] sm:$0xf]
        %v1329 = vld [vmem:[%s1325 + $0xc] sm:$0xf]
        %v1332 = vunpack.c.l.b16 %v1323
        %v1333 = vunpack.c.l.b16 %v1324
        %v1334 = vpack.c.b16 %v1333, %v1332
        %v1335 = vrot.slane %v1334, 3
        %v1340 = vunpack.c.l.b16 %v1326
        %v1341 = vunpack.c.l.b16 %v1327
        %v1342 = vunpack.c.l.b16 %v1328
        %v1343 = vunpack.c.l.b16 %v1329
        %v1344 = vpack.c.b16 %v1341, %v1340
        %v1345 = vpack.c.b16 %v1343, %v1342
        %v1349 = vsel %vm723, %v1335, 0
        %1351 = vmatprep.subr.bf16.mxu0 0
        %1352 = vmatpush1.bf16.msra.mxu0 0
        %1353 = vmatprep.subr.bf16.mxu0 0
        %1354 = vmatpush1.bf16.msra.mxu0 0
        %1355 = vmatprep.subr.bf16.mxu0 0
        %1356 = vmatpush1.bf16.msra.mxu0 0
        %1357 = vmatprep.subr.bf16.mxu0 0
        %1358 = vmatpush1.bf16.msra.mxu0 0
        %1359 = vmatprep.subr.bf16.mxu0 0
        %1360 = vmatpush1.bf16.msra.mxu0 0
        %1361 = vmatprep.subr.bf16.mxu0 0
        %1362 = vmatpush1.bf16.msra.mxu0 0
        %1363 = vmatprep.subr.bf16.mxu0 0
        %1364 = vmatpush1.bf16.msra.mxu0 %v1345
        %1365 = vmatprep.subr.bf16.mxu0 0
        %1366 = vmatpush1.bf16.msra.mxu0 %v1344
        %1367 = vmatprep.subr.bf16.mxu0 0
        %1368 = vmatpush2.bf16.msra.mxu0 0
        %1369 = vmatprep.subr.bf16.mxu0 0
        %1370 = vmatpush2.bf16.msra.mxu0 0
        %1371 = vmatprep.subr.bf16.mxu0 0
        %1372 = vmatpush2.bf16.msra.mxu0 0
        %1373 = vmatprep.subr.bf16.mxu0 0
        %1374 = vmatpush2.bf16.msra.mxu0 0
        %1375 = vmatprep.subr.bf16.mxu0 0
        %1376 = vmatpush2.bf16.msra.mxu0 0
        %1377 = vmatprep.subr.bf16.mxu0 0
        %1378 = vmatpush2.bf16.msra.mxu0 0
        %1379 = vmatprep.subr.bf16.mxu0 0
        %1380 = vmatpush2.bf16.msra.mxu0 0
        %1381 = vmatprep.subr.bf16.mxu0 0
        %1382 = vmatpush2.bf16.msra.mxu0 0
        %1383 = vmatprep.mubr.bf16.mxu0 0
        %1384 = vmatmul.mubr.bf16.gmra.mxu0 %v1349
        %v1385 = vpop.f32.mrf.mxu0
        %v1386 = vadd.f32 0.0, %v1385
        %v1387 = vpop.f32.mrf.mxu0
        %v1388 = vpop.f32.mrf.mxu0
        %v1389 = vpop.f32.mrf.mxu0
        %1390 = vdwg.mxu0
        %v1391 = vadd.f32 %v1318, %v1386
        %v1392 = vld [vmem:[#allocation2 + $0x4] sm:$0xf]
        %s1393 = scalar_lea.vmem [#allocation11], 64
        %v1394 = vld [vmem:[%s1393] sm:$0xf]
        %v1395 = vld [vmem:[%s1393 + $0x4] sm:$0xf]
        %v1396 = vld [vmem:[%s1393 + $0x8] sm:$0xf]
        %v1397 = vld [vmem:[%s1393 + $0xc] sm:$0xf]
        %v1402 = vunpack.c.l.b16 %v1394
        %v1403 = vunpack.c.l.b16 %v1395
        %v1404 = vunpack.c.l.b16 %v1396
        %v1405 = vunpack.c.l.b16 %v1397
        %v1406 = vpack.c.b16 %v1403, %v1402
        %v1407 = vpack.c.b16 %v1405, %v1404
        %v1411 = vsel %vm723, %v1392, 0
        %1413 = vmatprep.subr.bf16.mxu0 0
        %1414 = vmatpush1.bf16.msra.mxu0 0
        %1415 = vmatprep.subr.bf16.mxu0 0
        %1416 = vmatpush1.bf16.msra.mxu0 0
        %1417 = vmatprep.subr.bf16.mxu0 0
        %1418 = vmatpush1.bf16.msra.mxu0 0
        %1419 = vmatprep.subr.bf16.mxu0 0
        %1420 = vmatpush1.bf16.msra.mxu0 0
        %1421 = vmatprep.subr.bf16.mxu0 0
        %1422 = vmatpush1.bf16.msra.mxu0 0
        %1423 = vmatprep.subr.bf16.mxu0 0
        %1424 = vmatpush1.bf16.msra.mxu0 0
        %1425 = vmatprep.subr.bf16.mxu0 0
        %1426 = vmatpush1.bf16.msra.mxu0 %v1407
        %1427 = vmatprep.subr.bf16.mxu0 0
        %1428 = vmatpush1.bf16.msra.mxu0 %v1406
        %1429 = vmatprep.subr.bf16.mxu0 0
        %1430 = vmatpush2.bf16.msra.mxu0 0
        %1431 = vmatprep.subr.bf16.mxu0 0
        %1432 = vmatpush2.bf16.msra.mxu0 0
        %1433 = vmatprep.subr.bf16.mxu0 0
        %1434 = vmatpush2.bf16.msra.mxu0 0
        %1435 = vmatprep.subr.bf16.mxu0 0
        %1436 = vmatpush2.bf16.msra.mxu0 0
        %1437 = vmatprep.subr.bf16.mxu0 0
        %1438 = vmatpush2.bf16.msra.mxu0 0
        %1439 = vmatprep.subr.bf16.mxu0 0
        %1440 = vmatpush2.bf16.msra.mxu0 0
        %1441 = vmatprep.subr.bf16.mxu0 0
        %1442 = vmatpush2.bf16.msra.mxu0 0
        %1443 = vmatprep.subr.bf16.mxu0 0
        %1444 = vmatpush2.bf16.msra.mxu0 0
        %1445 = vmatprep.mubr.bf16.mxu0 0
        %1446 = vmatmul.mubr.bf16.gmra.mxu0 %v1411
        %v1447 = vpop.f32.mrf.mxu0
        %v1448 = vadd.f32 0.0, %v1447
        %v1449 = vpop.f32.mrf.mxu0
        %v1450 = vpop.f32.mrf.mxu0
        %v1451 = vpop.f32.mrf.mxu0
        %1452 = vdwg.mxu0
        %v1453 = vadd.f32 %v1391, %v1448
        %v1454 = vld [vmem:[#allocation2 + $0x4] sm:$0xe]
        %v1455 = vld [vmem:[#allocation2 + $0x8] sm:$0x1]
        %s1456 = scalar_lea.vmem [#allocation11], 80
        %v1457 = vld [vmem:[%s1456] sm:$0xf]
        %v1458 = vld [vmem:[%s1456 + $0x4] sm:$0xf]
        %v1459 = vld [vmem:[%s1456 + $0x8] sm:$0xf]
        %v1460 = vld [vmem:[%s1456 + $0xc] sm:$0xf]
        %v1463 = vunpack.c.l.b16 %v1454
        %v1464 = vunpack.c.l.b16 %v1455
        %v1465 = vpack.c.b16 %v1464, %v1463
        %v1466 = vrot.slane %v1465, 1
        %v1471 = vunpack.c.l.b16 %v1457
        %v1472 = vunpack.c.l.b16 %v1458
        %v1473 = vunpack.c.l.b16 %v1459
        %v1474 = vunpack.c.l.b16 %v1460
        %v1475 = vpack.c.b16 %v1472, %v1471
        %v1476 = vpack.c.b16 %v1474, %v1473
        %v1480 = vsel %vm723, %v1466, 0
        %1482 = vmatprep.subr.bf16.mxu0 0
        %1483 = vmatpush1.bf16.msra.mxu0 0
        %1484 = vmatprep.subr.bf16.mxu0 0
        %1485 = vmatpush1.bf16.msra.mxu0 0
        %1486 = vmatprep.subr.bf16.mxu0 0
        %1487 = vmatpush1.bf16.msra.mxu0 0
        %1488 = vmatprep.subr.bf16.mxu0 0
        %1489 = vmatpush1.bf16.msra.mxu0 0
        %1490 = vmatprep.subr.bf16.mxu0 0
        %1491 = vmatpush1.bf16.msra.mxu0 0
        %1492 = vmatprep.subr.bf16.mxu0 0
        %1493 = vmatpush1.bf16.msra.mxu0 0
        %1494 = vmatprep.subr.bf16.mxu0 0
        %1495 = vmatpush1.bf16.msra.mxu0 %v1476
        %1496 = vmatprep.subr.bf16.mxu0 0
        %1497 = vmatpush1.bf16.msra.mxu0 %v1475
        %1498 = vmatprep.subr.bf16.mxu0 0
        %1499 = vmatpush2.bf16.msra.mxu0 0
        %1500 = vmatprep.subr.bf16.mxu0 0
        %1501 = vmatpush2.bf16.msra.mxu0 0
        %1502 = vmatprep.subr.bf16.mxu0 0
        %1503 = vmatpush2.bf16.msra.mxu0 0
        %1504 = vmatprep.subr.bf16.mxu0 0
        %1505 = vmatpush2.bf16.msra.mxu0 0
        %1506 = vmatprep.subr.bf16.mxu0 0
        %1507 = vmatpush2.bf16.msra.mxu0 0
        %1508 = vmatprep.subr.bf16.mxu0 0
        %1509 = vmatpush2.bf16.msra.mxu0 0
        %1510 = vmatprep.subr.bf16.mxu0 0
        %1511 = vmatpush2.bf16.msra.mxu0 0
        %1512 = vmatprep.subr.bf16.mxu0 0
        %1513 = vmatpush2.bf16.msra.mxu0 0
        %1514 = vmatprep.mubr.bf16.mxu0 0
        %1515 = vmatmul.mubr.bf16.gmra.mxu0 %v1480
        %v1516 = vpop.f32.mrf.mxu0
        %v1517 = vadd.f32 0.0, %v1516
        %v1518 = vpop.f32.mrf.mxu0
        %v1519 = vpop.f32.mrf.mxu0
        %v1520 = vpop.f32.mrf.mxu0
        %1521 = vdwg.mxu0
        %v1522 = vadd.f32 %v1453, %v1517
        %v1523 = vtanh.pop %v1522
        %v1524 = vxor.u32 %v1522, 2147483648
        %v1525 = vmul.f32 %v1524, 1.442695
        %v1526 = vpow.pop %v1525
        %v1527 = vadd.f32 %v1526, 1.0
        %v1528 = vrcp.pop %v1527
        %v1529 = vmul.f32 1.0, %v1528
        %1531 = vrot.lane.b32.xlu0 %v1529, 96
        %v1532 = vpop.permute.xlu0 %1531
        %v1534 = vmul.f32 %v1523, %v1532
        %v1535 = vpack.c.bf16 %v1534, %v1534
        %s1536 = scalar_lea.vmem [#allocation15], 16
        %v1537 = vld [vmem:[%s1536] sm:$0xf]
        %v1538 = vld [vmem:[%s1536 + $0x4] sm:$0xf]
        %v1539 = vld [vmem:[%s1536 + $0x8] sm:$0xf]
        %v1540 = vld [vmem:[%s1536 + $0xc] sm:$0xf]
        %s1541 = scalar_lea.vmem [#allocation17], 1
        %v1542 = vld [vmem:[%s1541] sm:$0x1]
        %v1544 = vlaneseq
        %v1545 = vshrl.u32 %v1544, 7
        %v1546 = vsub.s32 0, %v1545
        %v1547 = vrot.slane %v1542, %v1546
        %v1553 = vunpack.c.l.b16 %v1537
        %v1554 = vunpack.c.l.b16 %v1538
        %v1555 = vunpack.c.l.b16 %v1539
        %v1556 = vunpack.c.l.b16 %v1540
        %v1557 = vpack.c.b16 %v1554, %v1553
        %v1558 = vpack.c.b16 %v1556, %v1555
        %v1562 = vsel %vm723, %v1535, 0
        %1564 = vmatprep.subr.bf16.mxu0 0
        %1565 = vmatpush1.bf16.msra.mxu0 0
        %1566 = vmatprep.subr.bf16.mxu0 0
        %1567 = vmatpush1.bf16.msra.mxu0 0
        %1568 = vmatprep.subr.bf16.mxu0 0
        %1569 = vmatpush1.bf16.msra.mxu0 0
        %1570 = vmatprep.subr.bf16.mxu0 0
        %1571 = vmatpush1.bf16.msra.mxu0 0
        %1572 = vmatprep.subr.bf16.mxu0 0
        %1573 = vmatpush1.bf16.msra.mxu0 0
        %1574 = vmatprep.subr.bf16.mxu0 0
        %1575 = vmatpush1.bf16.msra.mxu0 0
        %1576 = vmatprep.subr.bf16.mxu0 0
        %1577 = vmatpush1.bf16.msra.mxu0 %v1558
        %1578 = vmatprep.subr.bf16.mxu0 0
        %1579 = vmatpush1.bf16.msra.mxu0 %v1557
        %1580 = vmatprep.subr.bf16.mxu0 0
        %1581 = vmatpush2.bf16.msra.mxu0 0
        %1582 = vmatprep.subr.bf16.mxu0 0
        %1583 = vmatpush2.bf16.msra.mxu0 0
        %1584 = vmatprep.subr.bf16.mxu0 0
        %1585 = vmatpush2.bf16.msra.mxu0 0
        %1586 = vmatprep.subr.bf16.mxu0 0
        %1587 = vmatpush2.bf16.msra.mxu0 0
        %1588 = vmatprep.subr.bf16.mxu0 0
        %1589 = vmatpush2.bf16.msra.mxu0 0
        %1590 = vmatprep.subr.bf16.mxu0 0
        %1591 = vmatpush2.bf16.msra.mxu0 0
        %1592 = vmatprep.subr.bf16.mxu0 0
        %1593 = vmatpush2.bf16.msra.mxu0 0
        %1594 = vmatprep.subr.bf16.mxu0 0
        %1595 = vmatpush2.bf16.msra.mxu0 0
        %1596 = vmatprep.mubr.bf16.mxu0 0
        %1597 = vmatmul.mubr.bf16.gmra.mxu0 %v1562
        %v1598 = vpop.f32.mrf.mxu0
        %v1599 = vadd.f32 %v1547, %v1598
        %v1600 = vpop.f32.mrf.mxu0
        %v1601 = vpop.f32.mrf.mxu0
        %v1602 = vpop.f32.mrf.mxu0
        %1603 = vdwg.mxu0
        %v1604 = vadd.f32 %v1267, %v1599
        %v1605 = vmax.f32 %v1604, 0.0
        %v1606 = vpack.c.bf16 %v1605, %v1605
        %v1607 = vld [vmem:[%s11] sm:$0xf]
        %v1608 = vld [vmem:[%s11 + $0x4] sm:$0xf]
        %v1609 = vld [vmem:[%s11 + $0x8] sm:$0xf]
        %v1610 = vld [vmem:[%s11 + $0xc] sm:$0xf]
        %v1611 = vld [vmem:[%s12] sm:$0x1]
        %v1613 = vlaneseq
        %v1614 = vshrl.u32 %v1613, 7
        %v1615 = vsub.s32 0, %v1614
        %v1616 = vrot.slane %v1611, %v1615
        %1619 = vrot.lane.b32.xlu0 %v1606, 96
        %v1620 = vpop.permute.xlu0 %1619
        %v1625 = vunpack.c.l.b16 %v1607
        %v1626 = vunpack.c.l.b16 %v1608
        %v1627 = vunpack.c.l.b16 %v1609
        %v1628 = vunpack.c.l.b16 %v1610
        %v1629 = vpack.c.b16 %v1626, %v1625
        %v1630 = vpack.c.b16 %v1628, %v1627
        %v1634 = vsel %vm723, %v1620, 0
        %1636 = vmatprep.subr.bf16.mxu0 0
        %1637 = vmatpush1.bf16.msra.mxu0 0
        %1638 = vmatprep.subr.bf16.mxu0 0
        %1639 = vmatpush1.bf16.msra.mxu0 0
        %1640 = vmatprep.subr.bf16.mxu0 0
        %1641 = vmatpush1.bf16.msra.mxu0 0
        %1642 = vmatprep.subr.bf16.mxu0 0
        %1643 = vmatpush1.bf16.msra.mxu0 0
        %1644 = vmatprep.subr.bf16.mxu0 0
        %1645 = vmatpush1.bf16.msra.mxu0 0
        %1646 = vmatprep.subr.bf16.mxu0 0
        %1647 = vmatpush1.bf16.msra.mxu0 0
        %1648 = vmatprep.subr.bf16.mxu0 0
        %1649 = vmatpush1.bf16.msra.mxu0 %v1630
        %1650 = vmatprep.subr.bf16.mxu0 0
        %1651 = vmatpush1.bf16.msra.mxu0 %v1629
        %1652 = vmatprep.subr.bf16.mxu0 0
        %1653 = vmatpush2.bf16.msra.mxu0 0
        %1654 = vmatprep.subr.bf16.mxu0 0
        %1655 = vmatpush2.bf16.msra.mxu0 0
        %1656 = vmatprep.subr.bf16.mxu0 0
        %1657 = vmatpush2.bf16.msra.mxu0 0
        %1658 = vmatprep.subr.bf16.mxu0 0
        %1659 = vmatpush2.bf16.msra.mxu0 0
        %1660 = vmatprep.subr.bf16.mxu0 0
        %1661 = vmatpush2.bf16.msra.mxu0 0
        %1662 = vmatprep.subr.bf16.mxu0 0
        %1663 = vmatpush2.bf16.msra.mxu0 0
        %1664 = vmatprep.subr.bf16.mxu0 0
        %1665 = vmatpush2.bf16.msra.mxu0 0
        %1666 = vmatprep.subr.bf16.mxu0 0
        %1667 = vmatpush2.bf16.msra.mxu0 0
        %1668 = vmatprep.mubr.bf16.mxu0 0
        %1669 = vmatmul.mubr.bf16.gmra.mxu0 %v1634
        %v1670 = vpop.f32.mrf.mxu0
        %v1671 = vadd.f32 %v1616, %v1670
        %v1672 = vpop.f32.mrf.mxu0
        %v1673 = vpop.f32.mrf.mxu0
        %v1674 = vpop.f32.mrf.mxu0
        %1675 = vdwg.mxu0
        %v1676 = vmax.f32 %v1671, 0.0
        %v1677 = vpack.c.bf16 %v1676, %v1676
        %v1678 = vld [vmem:[%s13] sm:$0xf]
        %v1679 = vld [vmem:[%s13 + $0x4] sm:$0xf]
        %v1680 = vld [vmem:[%s13 + $0x8] sm:$0xf]
        %v1681 = vld [vmem:[%s13 + $0xc] sm:$0xf]
        %v1682 = vld [vmem:[%s14] sm:$0x1]
        %v1684 = vlaneseq
        %v1685 = vshrl.u32 %v1684, 7
        %v1686 = vsub.s32 0, %v1685
        %v1687 = vrot.slane %v1682, %v1686
        %v1693 = vunpack.c.l.b16 %v1678
        %v1694 = vunpack.c.l.b16 %v1679
        %v1695 = vunpack.c.l.b16 %v1680
        %v1696 = vunpack.c.l.b16 %v1681
        %v1697 = vpack.c.b16 %v1694, %v1693
        %v1698 = vpack.c.b16 %v1696, %v1695
        %v1702 = vsel %vm723, %v1677, 0
        %1704 = vmatprep.subr.bf16.mxu0 0
        %1705 = vmatpush1.bf16.msra.mxu0 0
        %1706 = vmatprep.subr.bf16.mxu0 0
        %1707 = vmatpush1.bf16.msra.mxu0 0
        %1708 = vmatprep.subr.bf16.mxu0 0
        %1709 = vmatpush1.bf16.msra.mxu0 0
        %1710 = vmatprep.subr.bf16.mxu0 0
        %1711 = vmatpush1.bf16.msra.mxu0 0
        %1712 = vmatprep.subr.bf16.mxu0 0
        %1713 = vmatpush1.bf16.msra.mxu0 0
        %1714 = vmatprep.subr.bf16.mxu0 0
        %1715 = vmatpush1.bf16.msra.mxu0 0
        %1716 = vmatprep.subr.bf16.mxu0 0
        %1717 = vmatpush1.bf16.msra.mxu0 %v1698
        %1718 = vmatprep.subr.bf16.mxu0 0
        %1719 = vmatpush1.bf16.msra.mxu0 %v1697
        %1720 = vmatprep.subr.bf16.mxu0 0
        %1721 = vmatpush2.bf16.msra.mxu0 0
        %1722 = vmatprep.subr.bf16.mxu0 0
        %1723 = vmatpush2.bf16.msra.mxu0 0
        %1724 = vmatprep.subr.bf16.mxu0 0
        %1725 = vmatpush2.bf16.msra.mxu0 0
        %1726 = vmatprep.subr.bf16.mxu0 0
        %1727 = vmatpush2.bf16.msra.mxu0 0
        %1728 = vmatprep.subr.bf16.mxu0 0
        %1729 = vmatpush2.bf16.msra.mxu0 0
        %1730 = vmatprep.subr.bf16.mxu0 0
        %1731 = vmatpush2.bf16.msra.mxu0 0
        %1732 = vmatprep.subr.bf16.mxu0 0
        %1733 = vmatpush2.bf16.msra.mxu0 0
        %1734 = vmatprep.subr.bf16.mxu0 0
        %1735 = vmatpush2.bf16.msra.mxu0 0
        %1736 = vmatprep.mubr.bf16.mxu0 0
        %1737 = vmatmul.mubr.bf16.gmra.mxu0 %v1702
        %v1738 = vpop.f32.mrf.mxu0
        %v1739 = vadd.f32 %v1687, %v1738
        %v1740 = vpop.f32.mrf.mxu0
        %v1741 = vpop.f32.mrf.mxu0
        %v1742 = vpop.f32.mrf.mxu0
        %1743 = vdwg.mxu0
        %v1744 = vsub.f32 0.0, %v1739
        %v1745 = vsub.f32 %v690, %v1739
        %v1746 = vmul.f32 %v1744, 1.442695
        %v1747 = vpow.pop %v1746
        %1749 = vrot.lane.b32.xlu0 %v1747, 4
        %v1750 = vpop.permute.xlu0 %1749
        %v1752 = vmul.f32 %v1745, %v1750
        %1754 = vrot.lane.b32.xlu0 %v1752, 124
        %v1755 = vpop.permute.xlu0 %1754
        %1758 = vrot.lane.b32.xlu0 %v690, 4
        %v1759 = vpop.permute.xlu0 %1758
        %v1761 = vsel %vm696, %v1755, %v1759
        %vm1762 = vcmask 64512
        %1763 = vst.msk [vmem:[%s660] sm:$0xff] %vm1762, %v1761
        %v1764 = vsel %vm696, %v1744, 0.0
        %v1765 = vrot.slane %v1764, 4
        %v1766 = vadd.f32 %v1764, %v1765
        %v1767 = vrot.slane %v1766, 2
        %v1768 = vadd.f32 %v1766, %v1767
        %v1769 = vrot.slane %v1768, 1
        %v1770 = vadd.f32 %v1768, %v1769
        %v1771 = vsel %vm696, %v1770, 0.0
        %1772 = vadd.xlane.f32.xlu0 %v1771
        %v1773 = vpop.xlane.xlu0 %1772
        %vm1774 = vcmask 0
        %1775 = vst.msk [vmem:[%s672] sm:$0x1] %vm1774, %v1773
        %s1776 = sand.u32 %s371, 1
        %s1777 = scalar_lea.sflag [#allocation5], %s1776
        %s1778 = sand.u32 %s371, 1
        %s1779 = smul.addr %s1778, 8
        %s1780 = scalar_lea.vmem [#allocation18], %s1779
        %p1781 = scmp.lt.s32.totalorder %s38, 1
        %s1782 = scalar_select %p1781, %s38, 1
        %s1783 = scalar_lea.vmem %s16, %s1782
        // Predicated region
        $region117: #{tpu_custom_call.1} parent=79 // pred_check
          %p1784 = pneg %p381
        $region118: #{tpu_custom_call.1} parent=79 // pred_check_branch
          %1786 = sbr.rel (%p1784) target = $region120
        $region119: #{tpu_custom_call.1} parent=79 // pred_region
          %s1788 = ssub.s32 128, 128
          %1789 = vsyncadd %s1777, %s1788
          %s1790 = smul.addr %s38, 128
          %s1791 = scalar_lea.hbm %s15, %s1790
          %s1793 = sshll.u32 %s1780, 4
          %s1794 = int_to_ptr.vmem [resolvable:$true] %s1793
          %1796 = dma.vmem_to_hbm [thread:$0]  %s1794, 128, %s1791, %s1777
        $region120: #{tpu_custom_call.1} parent=79 // pred_fallthru
          _
        // Predicated region
        $region121: #{tpu_custom_call.1} parent=79 // pred_check
          %p1797 = pneg %p407
        $region122: #{tpu_custom_call.1} parent=79 // pred_check_branch
          %1799 = sbr.rel (%p1797) target = $region124
        $region123: #{tpu_custom_call.1} parent=79 // pred_region
          _
        $region124: #{tpu_custom_call.1} parent=79 // pred_fallthru
          _
      $region80: #{tpu_custom_call.1} parent=5 // pred_fallthru
        _
      %p1800 = scmp.le.s32.totalorder 2, %s33
      // Predicated region
      $region125: #{tpu_custom_call.1} parent=5 // pred_check
        %p1801 = pneg %p1800
      $region126: #{tpu_custom_call.1} parent=5 // pred_check_branch
        %1803 = sbr.rel (%p1801) target = $region128
      $region127: #{tpu_custom_call.1} parent=5 // pred_region
        %s1804 = ssub.s32 %s33, 2
        // Predicated region
        $region129: #{tpu_custom_call.1} parent=127 // pred_check
          %p1805 = pneg %p387
        $region130: #{tpu_custom_call.1} parent=127 // pred_check_branch
          %1807 = sbr.rel (%p1805) target = $region132
        $region131: #{tpu_custom_call.1} parent=127 // pred_region
          %s1808 = sand.u32 %s372, 1
          %s1809 = scalar_lea.sflag [#allocation5], %s1808
          %s1810 = sand.u32 %s372, 1
          %s1811 = smul.addr %s1810, 8
          %s1812 = scalar_lea.vmem [#allocation18], %s1811
          %1813 = dma.done %s1809, 128
        $region132: #{tpu_custom_call.1} parent=127 // pred_fallthru
          _
        // Predicated region
        $region133: #{tpu_custom_call.1} parent=127 // pred_check
          %p1814 = pneg %p413
        $region134: #{tpu_custom_call.1} parent=127 // pred_check_branch
          %1816 = sbr.rel (%p1814) target = $region136
        $region135: #{tpu_custom_call.1} parent=127 // pred_region
          %p1817 = scmp.lt.s32.totalorder %s39, 1
          %s1818 = scalar_select %p1817, %s39, 1
          %s1819 = scalar_lea.vmem %s16, %s1818
        $region136: #{tpu_custom_call.1} parent=127 // pred_fallthru
          _
      $region128: #{tpu_custom_call.1} parent=5 // pred_fallthru
        _
    $region6: #{tpu_custom_call.1} parent=1 // loop_footer
      %s37 = sadd.s32 1, %s33
    $region7: #{tpu_custom_call.1} parent=1 // loop_footer_branch
      %32 = sbr.rel target = $region3
    $region8: #{tpu_custom_call.1} parent=1 // loop_exit
      _
    %1820 = vsyncpa [#allocation4], 1
    %s1821 = scalar_lea.sflag [#allocation4], 1
    %1822 = vsyncpa %s1821, 1
    %1823 = vsyncpa [#allocation7], 1
    %1824 = vsyncpa [#allocation10], 1
    %1825 = vsyncpa [#allocation13], 1
    %1826 = vsyncpa [#allocation16], 1
    %1827 = vsyncpa [#allocation5], 1
    %s1828 = scalar_lea.sflag [#allocation5], 1
    %1829 = vsyncpa %s1828, 1

</llo_original>
